<compile_context>
chip_gen: v7x
topology: tpu7x:2x2x1
jax: 0.10.0
libtpu: 0.0.40
codegen_flags: <defaults>
</compile_context>

<pallas_src>
import functools

import jax
import jax.numpy as jnp
from jax import lax
from jax.experimental import pallas as pl
from jax.experimental.pallas import tpu as pltpu


def _round_up(x, m):
    return (x + m - 1) // m * m


def _spec(block_shape, index_map, *, buffers=None):
    """BlockSpec with an optional buffer-count hint (graceful fallback)."""
    if buffers is not None:
        try:
            return pl.BlockSpec(block_shape, index_map,
                                pipeline_mode=pl.Buffered(buffers))
        except (TypeError, AttributeError):
            pass
    return pl.BlockSpec(block_shape, index_map)


# --------------------------------------------------------------------------- #
# Fused kernel: chunk projection (MXU) + serial recurrence + FC head
# --------------------------------------------------------------------------- #
def _rnn_fused_kernel(x_ref, wih_ref, whh_ref, brnn_ref, wfc_ref, bfc_ref,
                      out_ref, h_sc, p_sc, *, t_valid, apply_mask):
    """One grid step = one (batch-tile, time-chunk).

    x_ref   : (Btile, TC, Ip)  bf16  input chunk, native batch-first layout
    wih_ref : (Ip, Hp)         bf16  W_ih^T  (grid-invariant, single-buffered)
    whh_ref : (Hp, Hp)         bf16  W_hh^T  (grid-invariant, single-buffered)
    brnn_ref: (1, Hp)          f32   b_ih + b_hh
    wfc_ref : (Hp, Op)         bf16  W_fc^T
    bfc_ref : (1, Op)          f32   b_fc
    out_ref : (Btile, Op)      f32   final output (written on last chunk)
    h_sc    : (Btile, Hp)      f32   hidden state, resident across chunks
    p_sc    : (TC, Btile, Hp)  f32   projected chunk (time-major scratch)
    """
    c = pl.program_id(1)
    btile, tc, ip = x_ref.shape
    hp = whh_ref.shape[0]

    @pl.when(c == 0)
    def _():
        h_sc[...] = jnp.zeros_like(h_sc)

    # ---- project the whole chunk with one big bf16 MXU matmul -------------- #
    x2 = x_ref[...].reshape(btile * tc, ip)                     # tile-preserving
    p2 = (jnp.dot(x2, wih_ref[...], preferred_element_type=jnp.float32)
          + brnn_ref[...])                                      # (Btile*TC, Hp)
    p3 = p2.reshape(btile, tc, hp)
    # time-major scatter into VMEM scratch via static slices so the serial
    # loop only does cheap leading-axis dynamic reads.
    for t in range(tc):
        p_sc[t] = p3[:, t, :]

    # ---- serial recurrence over the chunk ----------------------------------- #
    # TODO(synk): if the bundle dump shows a per-step W_hh weight push, drive
    # the MXU explicitly (pltpu.matmul_push_rhs once per chunk).
    whh = whh_ref[...]                     # hoisted: reused by every step
    t0 = c * tc                            # global time offset of this chunk

    def step(t, h):
        pre = p_sc[t] + jnp.dot(h.astype(jnp.bfloat16), whh,
                                preferred_element_type=jnp.float32)
        h_new = jnp.tanh(pre)
        if apply_mask:                     # freeze h on padded trailing steps
            h_new = jnp.where(t0 + t < t_valid, h_new, h)
        return h_new

    h = lax.fori_loop(0, tc, step, h_sc[...], unroll=True)
    h_sc[...] = h

    # ---- fused FC head on the final chunk ------------------------------------ #
    @pl.when(c == pl.num_programs(1) - 1)
    def _():
        out_ref[...] = (jnp.dot(h.astype(jnp.bfloat16), wfc_ref[...],
                                preferred_element_type=jnp.float32)
                        + bfc_ref[...]).astype(out_ref.dtype)


# --------------------------------------------------------------------------- #
# Wrapper
# --------------------------------------------------------------------------- #
def rnn_model_forward(x, w_ih, w_hh, b_ih, b_hh, w_fc, b_fc, *,
                      t_chunk=64, batch_tile=None):
    """x: (B, T, I) batch_first (like PyTorch).  Returns (B, O) float32."""
    B, T, I = x.shape
    H = w_ih.shape[0]
    O = w_fc.shape[0]
    f32, bf16 = jnp.float32, jnp.bfloat16

    # lane/sublane-friendly padded sizes (zero padding keeps real units exact);
    # batch padded to 16 for bf16 sublane packing.
    Bp = _round_up(B, 16)
    Ip = _round_up(I, 128)
    Hp = _round_up(H, 128)
    Op = _round_up(O, 128)

    # batch tiling: 1 tile is best on 1-TC chips (v5e/v6e); on v7x pass
    # batch_tile=Bp//2 so the "parallel" axis spreads over both TensorCores.
    if batch_tile is None:
        Btile = Bp
    else:
        Btile = max(16, _round_up(min(batch_tile, Bp), 16))
    Bp = _round_up(Bp, Btile)
    n_btiles = Bp // Btile

    # time chunking: multiple of 16 (bf16 sublane tile) so the in-kernel
    # flatten of the x block is layout-preserving; cap unroll at 128.
    tc = max(16, min(_round_up(t_chunk, 16), _round_up(T, 16), 128))
    T_pad = _round_up(T, tc)
    n_chunks = T_pad // tc

    # bf16 MXU operands; biases stay f32 (added in f32, tanh in f32).
    wih_t = jnp.zeros((Ip, Hp), bf16).at[:I, :H].set(w_ih.T.astype(bf16))
    whh_t = jnp.zeros((Hp, Hp), bf16).at[:H, :H].set(w_hh.T.astype(bf16))
    wfc_t = jnp.zeros((Hp, Op), bf16).at[:H, :O].set(w_fc.T.astype(bf16))
    b_rnn = jnp.zeros((1, Hp), f32).at[0, :H].set((b_ih + b_hh).astype(f32))
    bfc = jnp.zeros((1, Op), f32).at[0, :O].set(b_fc.astype(f32))

    # single pad+cast of x (no separate transpose / concatenate copies): the
    # kernel reads x in its native batch-first layout; trailing padded time
    # steps are masked (hidden state frozen) inside the serial loop.
    x_pad = jnp.zeros((Bp, T_pad, Ip), bf16).at[:B, :T, :I].set(x.astype(bf16))

    # explicit VMEM budget sized from the actual footprint (headroom included).
    bytes_x = 2 * Btile * tc * Ip * 2                       # double-buffered chunk
    bytes_w = 2 * ((Ip * Hp + Hp * Hp + Hp * Op) * 2 + (Hp + Op) * 4)
    bytes_scr = Btile * Hp * 4 + tc * Btile * Hp * 4
    bytes_out = 2 * Btile * Op * 4
    vmem_limit = int(min(max(bytes_x + bytes_w + bytes_scr + bytes_out
                             + (8 << 20), 16 << 20), 100 << 20))

    # TODO(synk): for very large I/H (bf16 W_ih + W_hh approaching the VMEM
    # budget, ~2-4k on v7x) fall back to a two-pass variant with a separate
    # HBM-resident input projection.
    kernel = functools.partial(_rnn_fused_kernel,
                               t_valid=T, apply_mask=(T_pad != T))

    out_pad = pl.pallas_call(
        kernel,
        out_shape=jax.ShapeDtypeStruct((Bp, Op), f32),
        grid_spec=pltpu.PrefetchScalarGridSpec(
            num_scalar_prefetch=0,
            grid=(n_btiles, n_chunks),
            in_specs=[
                _spec((Btile, tc, Ip), lambda b, c: (b, c, 0)),      # x chunk
                _spec((Ip, Hp), lambda b, c: (0, 0), buffers=1),     # W_ih^T
                _spec((Hp, Hp), lambda b, c: (0, 0), buffers=1),     # W_hh^T
                _spec((1, Hp), lambda b, c: (0, 0), buffers=1),      # b_ih+b_hh
                _spec((Hp, Op), lambda b, c: (0, 0), buffers=1),     # W_fc^T
                _spec((1, Op), lambda b, c: (0, 0), buffers=1),      # b_fc
            ],
            out_specs=pl.BlockSpec((Btile, Op), lambda b, c: (b, 0)),
            scratch_shapes=[
                pltpu.VMEM((Btile, Hp), jnp.float32),        # hidden state
                pltpu.VMEM((tc, Btile, Hp), jnp.float32),    # projected chunk
            ]),
        compiler_params=pltpu.CompilerParams(
            dimension_semantics=("parallel", "arbitrary"),
            vmem_limit_bytes=vmem_limit),
    )(x_pad, wih_t, whh_t, b_rnn, wfc_t, bfc)

    return out_pad[:B, :O]


def rnn_model_ref(x, w_ih, w_hh, b_ih, b_hh, w_fc, b_fc):
    """Pure-JAX f32 reference of the PyTorch forward."""
    B, T, I = x.shape
    H = w_ih.shape[0]
    h = jnp.zeros((B, H), jnp.float32)
    for t in range(T):
        h = jnp.tanh(x[:, t, :] @ w_ih.T + b_ih + h @ w_hh.T + b_hh)
    return h @ w_fc.T + b_fc


if __name__ == "__main__":
    # small shapes consistent with the module
    B, T, I, H, O = 2, 8, 16, 32, 8

    key = jax.random.PRNGKey(0)
    ks = jax.random.split(key, 7)
    s = 1.0 / jnp.sqrt(jnp.float32(H))
    x = jax.random.normal(ks[0], (B, T, I), jnp.float32)
    w_ih = jax.random.uniform(ks[1], (H, I), jnp.float32, -s, s)
    w_hh = jax.random.uniform(ks[2], (H, H), jnp.float32, -s, s)
    b_ih = jax.random.uniform(ks[3], (H,), jnp.float32, -s, s)
    b_hh = jax.random.uniform(ks[4], (H,), jnp.float32, -s, s)
    w_fc = jax.random.uniform(ks[5], (O, H), jnp.float32, -s, s)
    b_fc = jax.random.uniform(ks[6], (O,), jnp.float32, -s, s)

    out = rnn_model_forward(x, w_ih, w_hh, b_ih, b_hh, w_fc, b_fc)
    out = jax.block_until_ready(out)

    ref = rnn_model_ref(x, w_ih, w_hh, b_ih, b_hh, w_fc, b_fc)
    assert out.shape == (B, O)
    # bf16 MXU operands with f32 accumulation -> small drift vs the f32 ref.
    assert jnp.allclose(out, ref, atol=5e-2, rtol=5e-2)

    print("KERNEL_OK")
</pallas_src>

<mosaic_0001>
module attributes {stable_mosaic.version = 11 : i64} {
  func.func @_rnn_fused_kernel(%arg0: i32, %arg1: i32, %arg2: memref<16x16x128xbf16, #tpu.memory_space<vmem>>, %arg3: memref<128x128xbf16, #tpu.memory_space<vmem>>, %arg4: memref<128x128xbf16, #tpu.memory_space<vmem>>, %arg5: memref<1x128xf32, #tpu.memory_space<vmem>>, %arg6: memref<128x128xbf16, #tpu.memory_space<vmem>>, %arg7: memref<1x128xf32, #tpu.memory_space<vmem>>, %arg8: memref<16x128xf32, #tpu.memory_space<vmem>>, %arg9: memref<16x128xf32, #tpu.memory_space<vmem>>, %arg10: memref<16x16x128xf32, #tpu.memory_space<vmem>>) attributes {dimension_semantics = [#tpu.dimension_semantics<parallel>, #tpu.dimension_semantics<arbitrary>], iteration_bounds = array<i64: 1, 1>, scalar_prefetch = 0 : i64, scratch_operands = 2 : i64, tpu.core_type = #tpu.core_type<tc>, window_params = [{transform_indices = @transform_0, window_bounds = array<i64: 16, 16, 128>}, {pipeline_mode = #tpu.pipeline_mode<synchronous>, transform_indices = @transform_1, window_bounds = array<i64: 128, 128>}, {pipeline_mode = #tpu.pipeline_mode<synchronous>, transform_indices = @transform_2, window_bounds = array<i64: 128, 128>}, {pipeline_mode = #tpu.pipeline_mode<synchronous>, transform_indices = @transform_3, window_bounds = array<i64: 1, 128>}, {pipeline_mode = #tpu.pipeline_mode<synchronous>, transform_indices = @transform_4, window_bounds = array<i64: 128, 128>}, {pipeline_mode = #tpu.pipeline_mode<synchronous>, transform_indices = @transform_5, window_bounds = array<i64: 1, 128>}, {transform_indices = @transform_6, window_bounds = array<i64: 16, 128>}]} {
    %c0_i32 = arith.constant 0 : i32
    %0 = arith.cmpi eq, %arg1, %c0_i32 : i32
    %1 = arith.extui %0 : i1 to i32
    %c0_i32_0 = arith.constant 0 : i32
    %2 = arith.cmpi ne, %1, %c0_i32_0 : i32
    scf.if %2 {
      %cst_114 = arith.constant 0.000000e+00 : f32
      %258 = vector.broadcast %cst_114 : f32 to vector<16x128xf32>
      %c0_115 = arith.constant 0 : index
      %c0_116 = arith.constant 0 : index
      %259 = vector.load %arg9[%c0_115, %c0_116] : memref<16x128xf32, #tpu.memory_space<vmem>>, vector<16x128xf32>
      tpu.vector_store %arg9[%c0_115, %c0_116], %258 {strides = array<i32>} : memref<16x128xf32, #tpu.memory_space<vmem>>, vector<16x128xf32>,
    } else {
    }
    %c0 = arith.constant 0 : index
    %c0_1 = arith.constant 0 : index
    %c0_2 = arith.constant 0 : index
    %3 = vector.load %arg2[%c0, %c0_1, %c0_2] : memref<16x16x128xbf16, #tpu.memory_space<vmem>>, vector<16x16x128xbf16>
    %4 = vector.shape_cast %3 : vector<16x16x128xbf16> to vector<256x128xbf16>
    %c0_3 = arith.constant 0 : index
    %c0_4 = arith.constant 0 : index
    %5 = vector.load %arg3[%c0_3, %c0_4] : memref<128x128xbf16, #tpu.memory_space<vmem>>, vector<128x128xbf16>
    %cst = arith.constant dense<0.000000e+00> : vector<256x128xf32>
    %6 = tpu.matmul %4, %5, %cst {dimension_numbers = #tpu.dot_dimension_numbers<[1], [0], [0], [1], [0, 0, 1, 1], [], []>} : vector<256x128xbf16>, vector<128x128xbf16>, vector<256x128xf32> -> vector<256x128xf32>
    %c0_5 = arith.constant 0 : index
    %c0_6 = arith.constant 0 : index
    %7 = vector.load %arg5[%c0_5, %c0_6] : memref<1x128xf32, #tpu.memory_space<vmem>>, vector<1x128xf32>
    %8 = vector.broadcast %7 : vector<1x128xf32> to vector<256x128xf32>
    %9 = arith.addf %6, %8 : vector<256x128xf32>
    %10 = vector.shape_cast %9 : vector<256x128xf32> to vector<16x16x128xf32>
    %11 = vector.extract_strided_slice %10 {offsets = [0, 0, 0], sizes = [16, 1, 128], strides = [1, 1, 1]} : vector<16x16x128xf32> to vector<16x1x128xf32>
    %12 = vector.shape_cast %11 : vector<16x1x128xf32> to vector<16x128xf32>
    %c0_7 = arith.constant 0 : index
    %c0_8 = arith.constant 0 : index
    %c0_9 = arith.constant 0 : index
    %13 = vector.load %arg10[%c0_7, %c0_8, %c0_9] : memref<16x16x128xf32, #tpu.memory_space<vmem>>, vector<1x16x128xf32>
    %14 = vector.shape_cast %13 : vector<1x16x128xf32> to vector<16x128xf32>
    %15 = vector.shape_cast %12 : vector<16x128xf32> to vector<1x16x128xf32>
    tpu.vector_store %arg10[%c0_7, %c0_8, %c0_9], %15 {strides = array<i32>} : memref<16x16x128xf32, #tpu.memory_space<vmem>>, vector<1x16x128xf32>,
    %16 = vector.extract_strided_slice %10 {offsets = [0, 1, 0], sizes = [16, 1, 128], strides = [1, 1, 1]} : vector<16x16x128xf32> to vector<16x1x128xf32>
    %17 = vector.shape_cast %16 : vector<16x1x128xf32> to vector<16x128xf32>
    %c1 = arith.constant 1 : index
    %c0_10 = arith.constant 0 : index
    %c0_11 = arith.constant 0 : index
    %18 = vector.load %arg10[%c1, %c0_10, %c0_11] : memref<16x16x128xf32, #tpu.memory_space<vmem>>, vector<1x16x128xf32>
    %19 = vector.shape_cast %18 : vector<1x16x128xf32> to vector<16x128xf32>
    %20 = vector.shape_cast %17 : vector<16x128xf32> to vector<1x16x128xf32>
    tpu.vector_store %arg10[%c1, %c0_10, %c0_11], %20 {strides = array<i32>} : memref<16x16x128xf32, #tpu.memory_space<vmem>>, vector<1x16x128xf32>,
    %21 = vector.extract_strided_slice %10 {offsets = [0, 2, 0], sizes = [16, 1, 128], strides = [1, 1, 1]} : vector<16x16x128xf32> to vector<16x1x128xf32>
    %22 = vector.shape_cast %21 : vector<16x1x128xf32> to vector<16x128xf32>
    %c2 = arith.constant 2 : index
    %c0_12 = arith.constant 0 : index
    %c0_13 = arith.constant 0 : index
    %23 = vector.load %arg10[%c2, %c0_12, %c0_13] : memref<16x16x128xf32, #tpu.memory_space<vmem>>, vector<1x16x128xf32>
    %24 = vector.shape_cast %23 : vector<1x16x128xf32> to vector<16x128xf32>
    %25 = vector.shape_cast %22 : vector<16x128xf32> to vector<1x16x128xf32>
    tpu.vector_store %arg10[%c2, %c0_12, %c0_13], %25 {strides = array<i32>} : memref<16x16x128xf32, #tpu.memory_space<vmem>>, vector<1x16x128xf32>,
    %26 = vector.extract_strided_slice %10 {offsets = [0, 3, 0], sizes = [16, 1, 128], strides = [1, 1, 1]} : vector<16x16x128xf32> to vector<16x1x128xf32>
    %27 = vector.shape_cast %26 : vector<16x1x128xf32> to vector<16x128xf32>
    %c3 = arith.constant 3 : index
    %c0_14 = arith.constant 0 : index
    %c0_15 = arith.constant 0 : index
    %28 = vector.load %arg10[%c3, %c0_14, %c0_15] : memref<16x16x128xf32, #tpu.memory_space<vmem>>, vector<1x16x128xf32>
    %29 = vector.shape_cast %28 : vector<1x16x128xf32> to vector<16x128xf32>
    %30 = vector.shape_cast %27 : vector<16x128xf32> to vector<1x16x128xf32>
    tpu.vector_store %arg10[%c3, %c0_14, %c0_15], %30 {strides = array<i32>} : memref<16x16x128xf32, #tpu.memory_space<vmem>>, vector<1x16x128xf32>,
    %31 = vector.extract_strided_slice %10 {offsets = [0, 4, 0], sizes = [16, 1, 128], strides = [1, 1, 1]} : vector<16x16x128xf32> to vector<16x1x128xf32>
    %32 = vector.shape_cast %31 : vector<16x1x128xf32> to vector<16x128xf32>
    %c4 = arith.constant 4 : index
    %c0_16 = arith.constant 0 : index
    %c0_17 = arith.constant 0 : index
    %33 = vector.load %arg10[%c4, %c0_16, %c0_17] : memref<16x16x128xf32, #tpu.memory_space<vmem>>, vector<1x16x128xf32>
    %34 = vector.shape_cast %33 : vector<1x16x128xf32> to vector<16x128xf32>
    %35 = vector.shape_cast %32 : vector<16x128xf32> to vector<1x16x128xf32>
    tpu.vector_store %arg10[%c4, %c0_16, %c0_17], %35 {strides = array<i32>} : memref<16x16x128xf32, #tpu.memory_space<vmem>>, vector<1x16x128xf32>,
    %36 = vector.extract_strided_slice %10 {offsets = [0, 5, 0], sizes = [16, 1, 128], strides = [1, 1, 1]} : vector<16x16x128xf32> to vector<16x1x128xf32>
    %37 = vector.shape_cast %36 : vector<16x1x128xf32> to vector<16x128xf32>
    %c5 = arith.constant 5 : index
    %c0_18 = arith.constant 0 : index
    %c0_19 = arith.constant 0 : index
    %38 = vector.load %arg10[%c5, %c0_18, %c0_19] : memref<16x16x128xf32, #tpu.memory_space<vmem>>, vector<1x16x128xf32>
    %39 = vector.shape_cast %38 : vector<1x16x128xf32> to vector<16x128xf32>
    %40 = vector.shape_cast %37 : vector<16x128xf32> to vector<1x16x128xf32>
    tpu.vector_store %arg10[%c5, %c0_18, %c0_19], %40 {strides = array<i32>} : memref<16x16x128xf32, #tpu.memory_space<vmem>>, vector<1x16x128xf32>,
    %41 = vector.extract_strided_slice %10 {offsets = [0, 6, 0], sizes = [16, 1, 128], strides = [1, 1, 1]} : vector<16x16x128xf32> to vector<16x1x128xf32>
    %42 = vector.shape_cast %41 : vector<16x1x128xf32> to vector<16x128xf32>
    %c6 = arith.constant 6 : index
    %c0_20 = arith.constant 0 : index
    %c0_21 = arith.constant 0 : index
    %43 = vector.load %arg10[%c6, %c0_20, %c0_21] : memref<16x16x128xf32, #tpu.memory_space<vmem>>, vector<1x16x128xf32>
    %44 = vector.shape_cast %43 : vector<1x16x128xf32> to vector<16x128xf32>
    %45 = vector.shape_cast %42 : vector<16x128xf32> to vector<1x16x128xf32>
    tpu.vector_store %arg10[%c6, %c0_20, %c0_21], %45 {strides = array<i32>} : memref<16x16x128xf32, #tpu.memory_space<vmem>>, vector<1x16x128xf32>,
    %46 = vector.extract_strided_slice %10 {offsets = [0, 7, 0], sizes = [16, 1, 128], strides = [1, 1, 1]} : vector<16x16x128xf32> to vector<16x1x128xf32>
    %47 = vector.shape_cast %46 : vector<16x1x128xf32> to vector<16x128xf32>
    %c7 = arith.constant 7 : index
    %c0_22 = arith.constant 0 : index
    %c0_23 = arith.constant 0 : index
    %48 = vector.load %arg10[%c7, %c0_22, %c0_23] : memref<16x16x128xf32, #tpu.memory_space<vmem>>, vector<1x16x128xf32>
    %49 = vector.shape_cast %48 : vector<1x16x128xf32> to vector<16x128xf32>
    %50 = vector.shape_cast %47 : vector<16x128xf32> to vector<1x16x128xf32>
    tpu.vector_store %arg10[%c7, %c0_22, %c0_23], %50 {strides = array<i32>} : memref<16x16x128xf32, #tpu.memory_space<vmem>>, vector<1x16x128xf32>,
    %51 = vector.extract_strided_slice %10 {offsets = [0, 8, 0], sizes = [16, 1, 128], strides = [1, 1, 1]} : vector<16x16x128xf32> to vector<16x1x128xf32>
    %52 = vector.shape_cast %51 : vector<16x1x128xf32> to vector<16x128xf32>
    %c8 = arith.constant 8 : index
    %c0_24 = arith.constant 0 : index
    %c0_25 = arith.constant 0 : index
    %53 = vector.load %arg10[%c8, %c0_24, %c0_25] : memref<16x16x128xf32, #tpu.memory_space<vmem>>, vector<1x16x128xf32>
    %54 = vector.shape_cast %53 : vector<1x16x128xf32> to vector<16x128xf32>
    %55 = vector.shape_cast %52 : vector<16x128xf32> to vector<1x16x128xf32>
    tpu.vector_store %arg10[%c8, %c0_24, %c0_25], %55 {strides = array<i32>} : memref<16x16x128xf32, #tpu.memory_space<vmem>>, vector<1x16x128xf32>,
    %56 = vector.extract_strided_slice %10 {offsets = [0, 9, 0], sizes = [16, 1, 128], strides = [1, 1, 1]} : vector<16x16x128xf32> to vector<16x1x128xf32>
    %57 = vector.shape_cast %56 : vector<16x1x128xf32> to vector<16x128xf32>
    %c9 = arith.constant 9 : index
    %c0_26 = arith.constant 0 : index
    %c0_27 = arith.constant 0 : index
    %58 = vector.load %arg10[%c9, %c0_26, %c0_27] : memref<16x16x128xf32, #tpu.memory_space<vmem>>, vector<1x16x128xf32>
    %59 = vector.shape_cast %58 : vector<1x16x128xf32> to vector<16x128xf32>
    %60 = vector.shape_cast %57 : vector<16x128xf32> to vector<1x16x128xf32>
    tpu.vector_store %arg10[%c9, %c0_26, %c0_27], %60 {strides = array<i32>} : memref<16x16x128xf32, #tpu.memory_space<vmem>>, vector<1x16x128xf32>,
    %61 = vector.extract_strided_slice %10 {offsets = [0, 10, 0], sizes = [16, 1, 128], strides = [1, 1, 1]} : vector<16x16x128xf32> to vector<16x1x128xf32>
    %62 = vector.shape_cast %61 : vector<16x1x128xf32> to vector<16x128xf32>
    %c10 = arith.constant 10 : index
    %c0_28 = arith.constant 0 : index
    %c0_29 = arith.constant 0 : index
    %63 = vector.load %arg10[%c10, %c0_28, %c0_29] : memref<16x16x128xf32, #tpu.memory_space<vmem>>, vector<1x16x128xf32>
    %64 = vector.shape_cast %63 : vector<1x16x128xf32> to vector<16x128xf32>
    %65 = vector.shape_cast %62 : vector<16x128xf32> to vector<1x16x128xf32>
    tpu.vector_store %arg10[%c10, %c0_28, %c0_29], %65 {strides = array<i32>} : memref<16x16x128xf32, #tpu.memory_space<vmem>>, vector<1x16x128xf32>,
    %66 = vector.extract_strided_slice %10 {offsets = [0, 11, 0], sizes = [16, 1, 128], strides = [1, 1, 1]} : vector<16x16x128xf32> to vector<16x1x128xf32>
    %67 = vector.shape_cast %66 : vector<16x1x128xf32> to vector<16x128xf32>
    %c11 = arith.constant 11 : index
    %c0_30 = arith.constant 0 : index
    %c0_31 = arith.constant 0 : index
    %68 = vector.load %arg10[%c11, %c0_30, %c0_31] : memref<16x16x128xf32, #tpu.memory_space<vmem>>, vector<1x16x128xf32>
    %69 = vector.shape_cast %68 : vector<1x16x128xf32> to vector<16x128xf32>
    %70 = vector.shape_cast %67 : vector<16x128xf32> to vector<1x16x128xf32>
    tpu.vector_store %arg10[%c11, %c0_30, %c0_31], %70 {strides = array<i32>} : memref<16x16x128xf32, #tpu.memory_space<vmem>>, vector<1x16x128xf32>,
    %71 = vector.extract_strided_slice %10 {offsets = [0, 12, 0], sizes = [16, 1, 128], strides = [1, 1, 1]} : vector<16x16x128xf32> to vector<16x1x128xf32>
    %72 = vector.shape_cast %71 : vector<16x1x128xf32> to vector<16x128xf32>
    %c12 = arith.constant 12 : index
    %c0_32 = arith.constant 0 : index
    %c0_33 = arith.constant 0 : index
    %73 = vector.load %arg10[%c12, %c0_32, %c0_33] : memref<16x16x128xf32, #tpu.memory_space<vmem>>, vector<1x16x128xf32>
    %74 = vector.shape_cast %73 : vector<1x16x128xf32> to vector<16x128xf32>
    %75 = vector.shape_cast %72 : vector<16x128xf32> to vector<1x16x128xf32>
    tpu.vector_store %arg10[%c12, %c0_32, %c0_33], %75 {strides = array<i32>} : memref<16x16x128xf32, #tpu.memory_space<vmem>>, vector<1x16x128xf32>,
    %76 = vector.extract_strided_slice %10 {offsets = [0, 13, 0], sizes = [16, 1, 128], strides = [1, 1, 1]} : vector<16x16x128xf32> to vector<16x1x128xf32>
    %77 = vector.shape_cast %76 : vector<16x1x128xf32> to vector<16x128xf32>
    %c13 = arith.constant 13 : index
    %c0_34 = arith.constant 0 : index
    %c0_35 = arith.constant 0 : index
    %78 = vector.load %arg10[%c13, %c0_34, %c0_35] : memref<16x16x128xf32, #tpu.memory_space<vmem>>, vector<1x16x128xf32>
    %79 = vector.shape_cast %78 : vector<1x16x128xf32> to vector<16x128xf32>
    %80 = vector.shape_cast %77 : vector<16x128xf32> to vector<1x16x128xf32>
    tpu.vector_store %arg10[%c13, %c0_34, %c0_35], %80 {strides = array<i32>} : memref<16x16x128xf32, #tpu.memory_space<vmem>>, vector<1x16x128xf32>,
    %81 = vector.extract_strided_slice %10 {offsets = [0, 14, 0], sizes = [16, 1, 128], strides = [1, 1, 1]} : vector<16x16x128xf32> to vector<16x1x128xf32>
    %82 = vector.shape_cast %81 : vector<16x1x128xf32> to vector<16x128xf32>
    %c14 = arith.constant 14 : index
    %c0_36 = arith.constant 0 : index
    %c0_37 = arith.constant 0 : index
    %83 = vector.load %arg10[%c14, %c0_36, %c0_37] : memref<16x16x128xf32, #tpu.memory_space<vmem>>, vector<1x16x128xf32>
    %84 = vector.shape_cast %83 : vector<1x16x128xf32> to vector<16x128xf32>
    %85 = vector.shape_cast %82 : vector<16x128xf32> to vector<1x16x128xf32>
    tpu.vector_store %arg10[%c14, %c0_36, %c0_37], %85 {strides = array<i32>} : memref<16x16x128xf32, #tpu.memory_space<vmem>>, vector<1x16x128xf32>,
    %86 = vector.extract_strided_slice %10 {offsets = [0, 15, 0], sizes = [16, 1, 128], strides = [1, 1, 1]} : vector<16x16x128xf32> to vector<16x1x128xf32>
    %87 = vector.shape_cast %86 : vector<16x1x128xf32> to vector<16x128xf32>
    %c15 = arith.constant 15 : index
    %c0_38 = arith.constant 0 : index
    %c0_39 = arith.constant 0 : index
    %88 = vector.load %arg10[%c15, %c0_38, %c0_39] : memref<16x16x128xf32, #tpu.memory_space<vmem>>, vector<1x16x128xf32>
    %89 = vector.shape_cast %88 : vector<1x16x128xf32> to vector<16x128xf32>
    %90 = vector.shape_cast %87 : vector<16x128xf32> to vector<1x16x128xf32>
    tpu.vector_store %arg10[%c15, %c0_38, %c0_39], %90 {strides = array<i32>} : memref<16x16x128xf32, #tpu.memory_space<vmem>>, vector<1x16x128xf32>,
    %c0_40 = arith.constant 0 : index
    %c0_41 = arith.constant 0 : index
    %91 = vector.load %arg4[%c0_40, %c0_41] : memref<128x128xbf16, #tpu.memory_space<vmem>>, vector<128x128xbf16>
    %c16_i32 = arith.constant 16 : i32
    %92 = arith.muli %arg1, %c16_i32 : i32
    %c0_42 = arith.constant 0 : index
    %c0_43 = arith.constant 0 : index
    %93 = vector.load %arg9[%c0_42, %c0_43] : memref<16x128xf32, #tpu.memory_space<vmem>>, vector<16x128xf32>
    %c0_i32_44 = arith.constant 0 : i32
    %94 = arith.index_cast %c0_i32_44 : i32 to index
    %c0_45 = arith.constant 0 : index
    %c0_46 = arith.constant 0 : index
    %95 = vector.load %arg10[%94, %c0_45, %c0_46] : memref<16x16x128xf32, #tpu.memory_space<vmem>>, vector<1x16x128xf32>
    %96 = vector.shape_cast %95 : vector<1x16x128xf32> to vector<16x128xf32>
    %97 = arith.truncf %93 : vector<16x128xf32> to vector<16x128xbf16>
    %cst_47 = arith.constant dense<0.000000e+00> : vector<16x128xf32>
    %98 = tpu.matmul %97, %91, %cst_47 {dimension_numbers = #tpu.dot_dimension_numbers<[1], [0], [0], [1], [0, 0, 1, 1], [], []>} : vector<16x128xbf16>, vector<128x128xbf16>, vector<16x128xf32> -> vector<16x128xf32>
    %99 = arith.addf %96, %98 : vector<16x128xf32>
    %100 = math.tanh %99 : vector<16x128xf32>
    %101 = arith.addi %92, %c0_i32_44 : i32
    %c8_i32 = arith.constant 8 : i32
    %102 = arith.cmpi slt, %101, %c8_i32 : i32
    %103 = arith.select %102, %100, %93 : vector<16x128xf32>
    %c1_i32 = arith.constant 1 : i32
    %104 = arith.index_cast %c1_i32 : i32 to index
    %c0_48 = arith.constant 0 : index
    %c0_49 = arith.constant 0 : index
    %105 = vector.load %arg10[%104, %c0_48, %c0_49] : memref<16x16x128xf32, #tpu.memory_space<vmem>>, vector<1x16x128xf32>
    %106 = vector.shape_cast %105 : vector<1x16x128xf32> to vector<16x128xf32>
    %107 = arith.truncf %103 : vector<16x128xf32> to vector<16x128xbf16>
    %cst_50 = arith.constant dense<0.000000e+00> : vector<16x128xf32>
    %108 = tpu.matmul %107, %91, %cst_50 {dimension_numbers = #tpu.dot_dimension_numbers<[1], [0], [0], [1], [0, 0, 1, 1], [], []>} : vector<16x128xbf16>, vector<128x128xbf16>, vector<16x128xf32> -> vector<16x128xf32>
    %109 = arith.addf %106, %108 : vector<16x128xf32>
    %110 = math.tanh %109 : vector<16x128xf32>
    %111 = arith.addi %92, %c1_i32 : i32
    %c8_i32_51 = arith.constant 8 : i32
    %112 = arith.cmpi slt, %111, %c8_i32_51 : i32
    %113 = arith.select %112, %110, %103 : vector<16x128xf32>
    %c2_i32 = arith.constant 2 : i32
    %114 = arith.index_cast %c2_i32 : i32 to index
    %c0_52 = arith.constant 0 : index
    %c0_53 = arith.constant 0 : index
    %115 = vector.load %arg10[%114, %c0_52, %c0_53] : memref<16x16x128xf32, #tpu.memory_space<vmem>>, vector<1x16x128xf32>
    %116 = vector.shape_cast %115 : vector<1x16x128xf32> to vector<16x128xf32>
    %117 = arith.truncf %113 : vector<16x128xf32> to vector<16x128xbf16>
    %cst_54 = arith.constant dense<0.000000e+00> : vector<16x128xf32>
    %118 = tpu.matmul %117, %91, %cst_54 {dimension_numbers = #tpu.dot_dimension_numbers<[1], [0], [0], [1], [0, 0, 1, 1], [], []>} : vector<16x128xbf16>, vector<128x128xbf16>, vector<16x128xf32> -> vector<16x128xf32>
    %119 = arith.addf %116, %118 : vector<16x128xf32>
    %120 = math.tanh %119 : vector<16x128xf32>
    %121 = arith.addi %92, %c2_i32 : i32
    %c8_i32_55 = arith.constant 8 : i32
    %122 = arith.cmpi slt, %121, %c8_i32_55 : i32
    %123 = arith.select %122, %120, %113 : vector<16x128xf32>
    %c3_i32 = arith.constant 3 : i32
    %124 = arith.index_cast %c3_i32 : i32 to index
    %c0_56 = arith.constant 0 : index
    %c0_57 = arith.constant 0 : index
    %125 = vector.load %arg10[%124, %c0_56, %c0_57] : memref<16x16x128xf32, #tpu.memory_space<vmem>>, vector<1x16x128xf32>
    %126 = vector.shape_cast %125 : vector<1x16x128xf32> to vector<16x128xf32>
    %127 = arith.truncf %123 : vector<16x128xf32> to vector<16x128xbf16>
    %cst_58 = arith.constant dense<0.000000e+00> : vector<16x128xf32>
    %128 = tpu.matmul %127, %91, %cst_58 {dimension_numbers = #tpu.dot_dimension_numbers<[1], [0], [0], [1], [0, 0, 1, 1], [], []>} : vector<16x128xbf16>, vector<128x128xbf16>, vector<16x128xf32> -> vector<16x128xf32>
    %129 = arith.addf %126, %128 : vector<16x128xf32>
    %130 = math.tanh %129 : vector<16x128xf32>
    %131 = arith.addi %92, %c3_i32 : i32
    %c8_i32_59 = arith.constant 8 : i32
    %132 = arith.cmpi slt, %131, %c8_i32_59 : i32
    %133 = arith.select %132, %130, %123 : vector<16x128xf32>
    %c4_i32 = arith.constant 4 : i32
    %134 = arith.index_cast %c4_i32 : i32 to index
    %c0_60 = arith.constant 0 : index
    %c0_61 = arith.constant 0 : index
    %135 = vector.load %arg10[%134, %c0_60, %c0_61] : memref<16x16x128xf32, #tpu.memory_space<vmem>>, vector<1x16x128xf32>
    %136 = vector.shape_cast %135 : vector<1x16x128xf32> to vector<16x128xf32>
    %137 = arith.truncf %133 : vector<16x128xf32> to vector<16x128xbf16>
    %cst_62 = arith.constant dense<0.000000e+00> : vector<16x128xf32>
    %138 = tpu.matmul %137, %91, %cst_62 {dimension_numbers = #tpu.dot_dimension_numbers<[1], [0], [0], [1], [0, 0, 1, 1], [], []>} : vector<16x128xbf16>, vector<128x128xbf16>, vector<16x128xf32> -> vector<16x128xf32>
    %139 = arith.addf %136, %138 : vector<16x128xf32>
    %140 = math.tanh %139 : vector<16x128xf32>
    %141 = arith.addi %92, %c4_i32 : i32
    %c8_i32_63 = arith.constant 8 : i32
    %142 = arith.cmpi slt, %141, %c8_i32_63 : i32
    %143 = arith.select %142, %140, %133 : vector<16x128xf32>
    %c5_i32 = arith.constant 5 : i32
    %144 = arith.index_cast %c5_i32 : i32 to index
    %c0_64 = arith.constant 0 : index
    %c0_65 = arith.constant 0 : index
    %145 = vector.load %arg10[%144, %c0_64, %c0_65] : memref<16x16x128xf32, #tpu.memory_space<vmem>>, vector<1x16x128xf32>
    %146 = vector.shape_cast %145 : vector<1x16x128xf32> to vector<16x128xf32>
    %147 = arith.truncf %143 : vector<16x128xf32> to vector<16x128xbf16>
    %cst_66 = arith.constant dense<0.000000e+00> : vector<16x128xf32>
    %148 = tpu.matmul %147, %91, %cst_66 {dimension_numbers = #tpu.dot_dimension_numbers<[1], [0], [0], [1], [0, 0, 1, 1], [], []>} : vector<16x128xbf16>, vector<128x128xbf16>, vector<16x128xf32> -> vector<16x128xf32>
    %149 = arith.addf %146, %148 : vector<16x128xf32>
    %150 = math.tanh %149 : vector<16x128xf32>
    %151 = arith.addi %92, %c5_i32 : i32
    %c8_i32_67 = arith.constant 8 : i32
    %152 = arith.cmpi slt, %151, %c8_i32_67 : i32
    %153 = arith.select %152, %150, %143 : vector<16x128xf32>
    %c6_i32 = arith.constant 6 : i32
    %154 = arith.index_cast %c6_i32 : i32 to index
    %c0_68 = arith.constant 0 : index
    %c0_69 = arith.constant 0 : index
    %155 = vector.load %arg10[%154, %c0_68, %c0_69] : memref<16x16x128xf32, #tpu.memory_space<vmem>>, vector<1x16x128xf32>
    %156 = vector.shape_cast %155 : vector<1x16x128xf32> to vector<16x128xf32>
    %157 = arith.truncf %153 : vector<16x128xf32> to vector<16x128xbf16>
    %cst_70 = arith.constant dense<0.000000e+00> : vector<16x128xf32>
    %158 = tpu.matmul %157, %91, %cst_70 {dimension_numbers = #tpu.dot_dimension_numbers<[1], [0], [0], [1], [0, 0, 1, 1], [], []>} : vector<16x128xbf16>, vector<128x128xbf16>, vector<16x128xf32> -> vector<16x128xf32>
    %159 = arith.addf %156, %158 : vector<16x128xf32>
    %160 = math.tanh %159 : vector<16x128xf32>
    %161 = arith.addi %92, %c6_i32 : i32
    %c8_i32_71 = arith.constant 8 : i32
    %162 = arith.cmpi slt, %161, %c8_i32_71 : i32
    %163 = arith.select %162, %160, %153 : vector<16x128xf32>
    %c7_i32 = arith.constant 7 : i32
    %164 = arith.index_cast %c7_i32 : i32 to index
    %c0_72 = arith.constant 0 : index
    %c0_73 = arith.constant 0 : index
    %165 = vector.load %arg10[%164, %c0_72, %c0_73] : memref<16x16x128xf32, #tpu.memory_space<vmem>>, vector<1x16x128xf32>
    %166 = vector.shape_cast %165 : vector<1x16x128xf32> to vector<16x128xf32>
    %167 = arith.truncf %163 : vector<16x128xf32> to vector<16x128xbf16>
    %cst_74 = arith.constant dense<0.000000e+00> : vector<16x128xf32>
    %168 = tpu.matmul %167, %91, %cst_74 {dimension_numbers = #tpu.dot_dimension_numbers<[1], [0], [0], [1], [0, 0, 1, 1], [], []>} : vector<16x128xbf16>, vector<128x128xbf16>, vector<16x128xf32> -> vector<16x128xf32>
    %169 = arith.addf %166, %168 : vector<16x128xf32>
    %170 = math.tanh %169 : vector<16x128xf32>
    %171 = arith.addi %92, %c7_i32 : i32
    %c8_i32_75 = arith.constant 8 : i32
    %172 = arith.cmpi slt, %171, %c8_i32_75 : i32
    %173 = arith.select %172, %170, %163 : vector<16x128xf32>
    %c8_i32_76 = arith.constant 8 : i32
    %174 = arith.index_cast %c8_i32_76 : i32 to index
    %c0_77 = arith.constant 0 : index
    %c0_78 = arith.constant 0 : index
    %175 = vector.load %arg10[%174, %c0_77, %c0_78] : memref<16x16x128xf32, #tpu.memory_space<vmem>>, vector<1x16x128xf32>
    %176 = vector.shape_cast %175 : vector<1x16x128xf32> to vector<16x128xf32>
    %177 = arith.truncf %173 : vector<16x128xf32> to vector<16x128xbf16>
    %cst_79 = arith.constant dense<0.000000e+00> : vector<16x128xf32>
    %178 = tpu.matmul %177, %91, %cst_79 {dimension_numbers = #tpu.dot_dimension_numbers<[1], [0], [0], [1], [0, 0, 1, 1], [], []>} : vector<16x128xbf16>, vector<128x128xbf16>, vector<16x128xf32> -> vector<16x128xf32>
    %179 = arith.addf %176, %178 : vector<16x128xf32>
    %180 = math.tanh %179 : vector<16x128xf32>
    %181 = arith.addi %92, %c8_i32_76 : i32
    %c8_i32_80 = arith.constant 8 : i32
    %182 = arith.cmpi slt, %181, %c8_i32_80 : i32
    %183 = arith.select %182, %180, %173 : vector<16x128xf32>
    %c9_i32 = arith.constant 9 : i32
    %184 = arith.index_cast %c9_i32 : i32 to index
    %c0_81 = arith.constant 0 : index
    %c0_82 = arith.constant 0 : index
    %185 = vector.load %arg10[%184, %c0_81, %c0_82] : memref<16x16x128xf32, #tpu.memory_space<vmem>>, vector<1x16x128xf32>
    %186 = vector.shape_cast %185 : vector<1x16x128xf32> to vector<16x128xf32>
    %187 = arith.truncf %183 : vector<16x128xf32> to vector<16x128xbf16>
    %cst_83 = arith.constant dense<0.000000e+00> : vector<16x128xf32>
    %188 = tpu.matmul %187, %91, %cst_83 {dimension_numbers = #tpu.dot_dimension_numbers<[1], [0], [0], [1], [0, 0, 1, 1], [], []>} : vector<16x128xbf16>, vector<128x128xbf16>, vector<16x128xf32> -> vector<16x128xf32>
    %189 = arith.addf %186, %188 : vector<16x128xf32>
    %190 = math.tanh %189 : vector<16x128xf32>
    %191 = arith.addi %92, %c9_i32 : i32
    %c8_i32_84 = arith.constant 8 : i32
    %192 = arith.cmpi slt, %191, %c8_i32_84 : i32
    %193 = arith.select %192, %190, %183 : vector<16x128xf32>
    %c10_i32 = arith.constant 10 : i32
    %194 = arith.index_cast %c10_i32 : i32 to index
    %c0_85 = arith.constant 0 : index
    %c0_86 = arith.constant 0 : index
    %195 = vector.load %arg10[%194, %c0_85, %c0_86] : memref<16x16x128xf32, #tpu.memory_space<vmem>>, vector<1x16x128xf32>
    %196 = vector.shape_cast %195 : vector<1x16x128xf32> to vector<16x128xf32>
    %197 = arith.truncf %193 : vector<16x128xf32> to vector<16x128xbf16>
    %cst_87 = arith.constant dense<0.000000e+00> : vector<16x128xf32>
    %198 = tpu.matmul %197, %91, %cst_87 {dimension_numbers = #tpu.dot_dimension_numbers<[1], [0], [0], [1], [0, 0, 1, 1], [], []>} : vector<16x128xbf16>, vector<128x128xbf16>, vector<16x128xf32> -> vector<16x128xf32>
    %199 = arith.addf %196, %198 : vector<16x128xf32>
    %200 = math.tanh %199 : vector<16x128xf32>
    %201 = arith.addi %92, %c10_i32 : i32
    %c8_i32_88 = arith.constant 8 : i32
    %202 = arith.cmpi slt, %201, %c8_i32_88 : i32
    %203 = arith.select %202, %200, %193 : vector<16x128xf32>
    %c11_i32 = arith.constant 11 : i32
    %204 = arith.index_cast %c11_i32 : i32 to index
    %c0_89 = arith.constant 0 : index
    %c0_90 = arith.constant 0 : index
    %205 = vector.load %arg10[%204, %c0_89, %c0_90] : memref<16x16x128xf32, #tpu.memory_space<vmem>>, vector<1x16x128xf32>
    %206 = vector.shape_cast %205 : vector<1x16x128xf32> to vector<16x128xf32>
    %207 = arith.truncf %203 : vector<16x128xf32> to vector<16x128xbf16>
    %cst_91 = arith.constant dense<0.000000e+00> : vector<16x128xf32>
    %208 = tpu.matmul %207, %91, %cst_91 {dimension_numbers = #tpu.dot_dimension_numbers<[1], [0], [0], [1], [0, 0, 1, 1], [], []>} : vector<16x128xbf16>, vector<128x128xbf16>, vector<16x128xf32> -> vector<16x128xf32>
    %209 = arith.addf %206, %208 : vector<16x128xf32>
    %210 = math.tanh %209 : vector<16x128xf32>
    %211 = arith.addi %92, %c11_i32 : i32
    %c8_i32_92 = arith.constant 8 : i32
    %212 = arith.cmpi slt, %211, %c8_i32_92 : i32
    %213 = arith.select %212, %210, %203 : vector<16x128xf32>
    %c12_i32 = arith.constant 12 : i32
    %214 = arith.index_cast %c12_i32 : i32 to index
    %c0_93 = arith.constant 0 : index
    %c0_94 = arith.constant 0 : index
    %215 = vector.load %arg10[%214, %c0_93, %c0_94] : memref<16x16x128xf32, #tpu.memory_space<vmem>>, vector<1x16x128xf32>
    %216 = vector.shape_cast %215 : vector<1x16x128xf32> to vector<16x128xf32>
    %217 = arith.truncf %213 : vector<16x128xf32> to vector<16x128xbf16>
    %cst_95 = arith.constant dense<0.000000e+00> : vector<16x128xf32>
    %218 = tpu.matmul %217, %91, %cst_95 {dimension_numbers = #tpu.dot_dimension_numbers<[1], [0], [0], [1], [0, 0, 1, 1], [], []>} : vector<16x128xbf16>, vector<128x128xbf16>, vector<16x128xf32> -> vector<16x128xf32>
    %219 = arith.addf %216, %218 : vector<16x128xf32>
    %220 = math.tanh %219 : vector<16x128xf32>
    %221 = arith.addi %92, %c12_i32 : i32
    %c8_i32_96 = arith.constant 8 : i32
    %222 = arith.cmpi slt, %221, %c8_i32_96 : i32
    %223 = arith.select %222, %220, %213 : vector<16x128xf32>
    %c13_i32 = arith.constant 13 : i32
    %224 = arith.index_cast %c13_i32 : i32 to index
    %c0_97 = arith.constant 0 : index
    %c0_98 = arith.constant 0 : index
    %225 = vector.load %arg10[%224, %c0_97, %c0_98] : memref<16x16x128xf32, #tpu.memory_space<vmem>>, vector<1x16x128xf32>
    %226 = vector.shape_cast %225 : vector<1x16x128xf32> to vector<16x128xf32>
    %227 = arith.truncf %223 : vector<16x128xf32> to vector<16x128xbf16>
    %cst_99 = arith.constant dense<0.000000e+00> : vector<16x128xf32>
    %228 = tpu.matmul %227, %91, %cst_99 {dimension_numbers = #tpu.dot_dimension_numbers<[1], [0], [0], [1], [0, 0, 1, 1], [], []>} : vector<16x128xbf16>, vector<128x128xbf16>, vector<16x128xf32> -> vector<16x128xf32>
    %229 = arith.addf %226, %228 : vector<16x128xf32>
    %230 = math.tanh %229 : vector<16x128xf32>
    %231 = arith.addi %92, %c13_i32 : i32
    %c8_i32_100 = arith.constant 8 : i32
    %232 = arith.cmpi slt, %231, %c8_i32_100 : i32
    %233 = arith.select %232, %230, %223 : vector<16x128xf32>
    %c14_i32 = arith.constant 14 : i32
    %234 = arith.index_cast %c14_i32 : i32 to index
    %c0_101 = arith.constant 0 : index
    %c0_102 = arith.constant 0 : index
    %235 = vector.load %arg10[%234, %c0_101, %c0_102] : memref<16x16x128xf32, #tpu.memory_space<vmem>>, vector<1x16x128xf32>
    %236 = vector.shape_cast %235 : vector<1x16x128xf32> to vector<16x128xf32>
    %237 = arith.truncf %233 : vector<16x128xf32> to vector<16x128xbf16>
    %cst_103 = arith.constant dense<0.000000e+00> : vector<16x128xf32>
    %238 = tpu.matmul %237, %91, %cst_103 {dimension_numbers = #tpu.dot_dimension_numbers<[1], [0], [0], [1], [0, 0, 1, 1], [], []>} : vector<16x128xbf16>, vector<128x128xbf16>, vector<16x128xf32> -> vector<16x128xf32>
    %239 = arith.addf %236, %238 : vector<16x128xf32>
    %240 = math.tanh %239 : vector<16x128xf32>
    %241 = arith.addi %92, %c14_i32 : i32
    %c8_i32_104 = arith.constant 8 : i32
    %242 = arith.cmpi slt, %241, %c8_i32_104 : i32
    %243 = arith.select %242, %240, %233 : vector<16x128xf32>
    %c15_i32 = arith.constant 15 : i32
    %244 = arith.index_cast %c15_i32 : i32 to index
    %c0_105 = arith.constant 0 : index
    %c0_106 = arith.constant 0 : index
    %245 = vector.load %arg10[%244, %c0_105, %c0_106] : memref<16x16x128xf32, #tpu.memory_space<vmem>>, vector<1x16x128xf32>
    %246 = vector.shape_cast %245 : vector<1x16x128xf32> to vector<16x128xf32>
    %247 = arith.truncf %243 : vector<16x128xf32> to vector<16x128xbf16>
    %cst_107 = arith.constant dense<0.000000e+00> : vector<16x128xf32>
    %248 = tpu.matmul %247, %91, %cst_107 {dimension_numbers = #tpu.dot_dimension_numbers<[1], [0], [0], [1], [0, 0, 1, 1], [], []>} : vector<16x128xbf16>, vector<128x128xbf16>, vector<16x128xf32> -> vector<16x128xf32>
    %249 = arith.addf %246, %248 : vector<16x128xf32>
    %250 = math.tanh %249 : vector<16x128xf32>
    %251 = arith.addi %92, %c15_i32 : i32
    %c8_i32_108 = arith.constant 8 : i32
    %252 = arith.cmpi slt, %251, %c8_i32_108 : i32
    %253 = arith.select %252, %250, %243 : vector<16x128xf32>
    %c16_i32_109 = arith.constant 16 : i32
    %c0_110 = arith.constant 0 : index
    %c0_111 = arith.constant 0 : index
    %254 = vector.load %arg9[%c0_110, %c0_111] : memref<16x128xf32, #tpu.memory_space<vmem>>, vector<16x128xf32>
    tpu.vector_store %arg9[%c0_110, %c0_111], %253 {strides = array<i32>} : memref<16x128xf32, #tpu.memory_space<vmem>>, vector<16x128xf32>,
    %c0_i32_112 = arith.constant 0 : i32
    %255 = arith.cmpi eq, %arg1, %c0_i32_112 : i32
    %256 = arith.extui %255 : i1 to i32
    %c0_i32_113 = arith.constant 0 : i32
    %257 = arith.cmpi ne, %256, %c0_i32_113 : i32
    scf.if %257 {
      %258 = arith.truncf %253 : vector<16x128xf32> to vector<16x128xbf16>
      %c0_114 = arith.constant 0 : index
      %c0_115 = arith.constant 0 : index
      %259 = vector.load %arg6[%c0_114, %c0_115] : memref<128x128xbf16, #tpu.memory_space<vmem>>, vector<128x128xbf16>
      %cst_116 = arith.constant dense<0.000000e+00> : vector<16x128xf32>
      %260 = tpu.matmul %258, %259, %cst_116 {dimension_numbers = #tpu.dot_dimension_numbers<[1], [0], [0], [1], [0, 0, 1, 1], [], []>} : vector<16x128xbf16>, vector<128x128xbf16>, vector<16x128xf32> -> vector<16x128xf32>
      %c0_117 = arith.constant 0 : index
      %c0_118 = arith.constant 0 : index
      %261 = vector.load %arg7[%c0_117, %c0_118] : memref<1x128xf32, #tpu.memory_space<vmem>>, vector<1x128xf32>
      %262 = vector.broadcast %261 : vector<1x128xf32> to vector<16x128xf32>
      %263 = arith.addf %260, %262 : vector<16x128xf32>
      %c0_119 = arith.constant 0 : index
      %c0_120 = arith.constant 0 : index
      %264 = vector.load %arg8[%c0_119, %c0_120] : memref<16x128xf32, #tpu.memory_space<vmem>>, vector<16x128xf32>
      tpu.vector_store %arg8[%c0_119, %c0_120], %263 {strides = array<i32>} : memref<16x128xf32, #tpu.memory_space<vmem>>, vector<16x128xf32>,
    } else {
    }
    return
  }
  func.func @transform_0(%arg0: i32, %arg1: i32) -> (i32, i32, i32) {
    %c0_i32 = arith.constant 0 : i32
    %c0_i32_0 = arith.constant 0 : i32
    return %arg0, %arg1, %c0_i32 : i32, i32, i32
  }
  func.func @transform_1(%arg0: i32, %arg1: i32) -> (i32, i32) {
    %c0_i32 = arith.constant 0 : i32
    %c0_i32_0 = arith.constant 0 : i32
    %c0_i32_1 = arith.constant 0 : i32
    return %c0_i32, %c0_i32_0 : i32, i32
  }
  func.func @transform_2(%arg0: i32, %arg1: i32) -> (i32, i32) {
    %c0_i32 = arith.constant 0 : i32
    %c0_i32_0 = arith.constant 0 : i32
    %c0_i32_1 = arith.constant 0 : i32
    return %c0_i32, %c0_i32_0 : i32, i32
  }
  func.func @transform_3(%arg0: i32, %arg1: i32) -> (i32, i32) {
    %c0_i32 = arith.constant 0 : i32
    %c0_i32_0 = arith.constant 0 : i32
    %c0_i32_1 = arith.constant 0 : i32
    return %c0_i32, %c0_i32_0 : i32, i32
  }
  func.func @transform_4(%arg0: i32, %arg1: i32) -> (i32, i32) {
    %c0_i32 = arith.constant 0 : i32
    %c0_i32_0 = arith.constant 0 : i32
    %c0_i32_1 = arith.constant 0 : i32
    return %c0_i32, %c0_i32_0 : i32, i32
  }
  func.func @transform_5(%arg0: i32, %arg1: i32) -> (i32, i32) {
    %c0_i32 = arith.constant 0 : i32
    %c0_i32_0 = arith.constant 0 : i32
    %c0_i32_1 = arith.constant 0 : i32
    return %c0_i32, %c0_i32_0 : i32, i32
  }
  func.func @transform_6(%arg0: i32, %arg1: i32) -> (i32, i32) {
    %c0_i32 = arith.constant 0 : i32
    %c0_i32_0 = arith.constant 0 : i32
    return %arg0, %c0_i32 : i32, i32
  }
}

</mosaic_0001>

<llo_original>
// kernel: tpu_custom_call.1
$region0: #{tpu_custom_call.1}
  #allocation0 [shape = 'u32[]', space=smem, size = 0x4, offset = 0x4, fixed_abs, tag = 'smem constant byte address 0x4 - core index']
  #allocation1 [shape = 'u32[144,128]{1,0:T(1,128)}', space=vmem, size = 0x12000, scoped, tag = 'internal scratch']
  #allocation2 [shape = 'f32[16,128]{1,0:T(8,128)}', space=vmem, size = 0x2000, scoped, tag = 'scratch operand']
  #allocation3 [shape = 'f32[16,16,128]{2,1,0:T(8,128)}', space=vmem, size = 0x20000, scoped, tag = 'scratch operand']
  %s0 = inlined_call_operand.hbm [shape: bf16[16,16,128], index: 0, kind: input, shape index: {}]
  %s1 = inlined_call_operand.hbm [shape: bf16[128,128], index: 1, kind: input, shape index: {}]
  %s2 = inlined_call_operand.hbm [shape: bf16[128,128], index: 2, kind: input, shape index: {}]
  %s3 = inlined_call_operand.vmem [shape: f32[1,128], index: 3, kind: input, shape index: {}]
  %s4 = inlined_call_operand.hbm [shape: bf16[128,128], index: 4, kind: input, shape index: {}]
  %s5 = inlined_call_operand.vmem [shape: f32[1,128], index: 5, kind: input, shape index: {}]
  %s6 = inlined_call_operand.hbm [shape: f32[16,128], index: 6, kind: output, shape index: {}]
  %s7 = sld [smem:[#allocation0]]
  $region58: #{tpu_custom_call.1} parent=0
    _
  %s9 = ssub.s32 1, %s7
  %s10 = scalar_select 0, %s9, %s7
  $region1: #{tpu_custom_call.1} parent=0
    #allocation4 [shape = 'u8[65536]{0}', space=vmem, size = 0x10000, scoped, tag = 'input window, operand 0, single buffered']
    #allocation5 [shape = 's32[1]{0}', space=sflag, size = 0x4, scoped, tag = 'scoped memory for tpu_custom_call.1']
    #allocation6 [shape = 's32[1]{0}', space=sflag, size = 0x4, scoped, tag = 'scoped memory for tpu_custom_call.1']
    #allocation7 [shape = 'u8[32768]{0}', space=vmem, size = 0x8000, scoped, tag = 'input window, operand 1, single buffered']
    #allocation8 [shape = 's32[1]{0}', space=sflag, size = 0x4, scoped, tag = 'scoped memory for tpu_custom_call.1']
    #allocation9 [shape = 'u8[32768]{0}', space=vmem, size = 0x8000, scoped, tag = 'input window, operand 2, single buffered']
    #allocation10 [shape = 'u8[32768]{0}', space=vmem, size = 0x8000, scoped, tag = 'input window, operand 4, single buffered']
    #allocation11 [shape = 's32[1]{0}', space=sflag, size = 0x4, scoped, tag = 'scoped memory for tpu_custom_call.1']
    #allocation12 [shape = 'u8[8192]{0}', space=vmem, size = 0x2000, scoped, tag = 'output window, operand 0, single buffered']
    %11 = vsyncpa [#allocation5], 0
    %12 = vsyncpa [#allocation8], 0
    %13 = vsyncpa [#allocation11], 0
    %14 = vsyncpa [#allocation6], 0
    // Predicated region
    $region2: #{tpu_custom_call.1} parent=1 // pred_check
      _
    $region3: #{tpu_custom_call.1} parent=1 // pred_check_branch
      %16 = sbr.rel (0) target = $region5
    $region4: #{tpu_custom_call.1} parent=1 // pred_region
      %s18 = ssub.s32 2048, 2048
      %19 = vsyncadd [#allocation5], %s18
      %s20 = sshll.u32 [#allocation4], 4
      %s21 = int_to_ptr.vmem [resolvable:$true] %s20
      %26 = dma.hbm_to_vmem [thread:$0]  %s0, 2048, %s21, [#allocation5], 64, 64, 4
    $region5: #{tpu_custom_call.1} parent=1 // pred_fallthru
      _
    // Predicated region
    $region6: #{tpu_custom_call.1} parent=1 // pred_check
      _
    $region7: #{tpu_custom_call.1} parent=1 // pred_check_branch
      %28 = sbr.rel (0) target = $region9
    $region8: #{tpu_custom_call.1} parent=1 // pred_region
      %s30 = ssub.s32 1024, 1024
      %31 = vsyncadd [#allocation8], %s30
      %s32 = sshll.u32 [#allocation7], 4
      %s33 = int_to_ptr.vmem [resolvable:$true] %s32
      %38 = dma.hbm_to_vmem [thread:$0]  %s1, 1024, %s33, [#allocation8], 64, 64, 4
    $region9: #{tpu_custom_call.1} parent=1 // pred_fallthru
      _
    // Predicated region
    $region10: #{tpu_custom_call.1} parent=1 // pred_check
      _
    $region11: #{tpu_custom_call.1} parent=1 // pred_check_branch
      %40 = sbr.rel (0) target = $region13
    $region12: #{tpu_custom_call.1} parent=1 // pred_region
      %s42 = ssub.s32 1024, 1024
      %43 = vsyncadd [#allocation8], %s42
      %s44 = sshll.u32 [#allocation9], 4
      %s45 = int_to_ptr.vmem [resolvable:$true] %s44
      %50 = dma.hbm_to_vmem [thread:$0]  %s2, 1024, %s45, [#allocation8], 64, 64, 4
    $region13: #{tpu_custom_call.1} parent=1 // pred_fallthru
      _
    // Predicated region
    $region14: #{tpu_custom_call.1} parent=1 // pred_check
      _
    $region15: #{tpu_custom_call.1} parent=1 // pred_check_branch
      %52 = sbr.rel (0) target = $region17
    $region16: #{tpu_custom_call.1} parent=1 // pred_region
      _
    $region17: #{tpu_custom_call.1} parent=1 // pred_fallthru
      _
    // Predicated region
    $region18: #{tpu_custom_call.1} parent=1 // pred_check
      _
    $region19: #{tpu_custom_call.1} parent=1 // pred_check_branch
      %54 = sbr.rel (0) target = $region21
    $region20: #{tpu_custom_call.1} parent=1 // pred_region
      %s56 = ssub.s32 1024, 1024
      %57 = vsyncadd [#allocation11], %s56
      %s58 = sshll.u32 [#allocation10], 4
      %s59 = int_to_ptr.vmem [resolvable:$true] %s58
      %64 = dma.hbm_to_vmem [thread:$0]  %s4, 1024, %s59, [#allocation11], 64, 64, 4
    $region21: #{tpu_custom_call.1} parent=1 // pred_fallthru
      _
    // Predicated region
    $region22: #{tpu_custom_call.1} parent=1 // pred_check
      _
    $region23: #{tpu_custom_call.1} parent=1 // pred_check_branch
      %66 = sbr.rel (0) target = $region25
    $region24: #{tpu_custom_call.1} parent=1 // pred_region
      _
    $region25: #{tpu_custom_call.1} parent=1 // pred_fallthru
      _
    // Predicated region
    $region26: #{tpu_custom_call.1} parent=1 // pred_check
      _
    $region27: #{tpu_custom_call.1} parent=1 // pred_check_branch
      %68 = sbr.rel (0) target = $region29
    $region28: #{tpu_custom_call.1} parent=1 // pred_region
      %69 = dma.done [#allocation5], 2048
    $region29: #{tpu_custom_call.1} parent=1 // pred_fallthru
      _
    // Predicated region
    $region30: #{tpu_custom_call.1} parent=1 // pred_check
      _
    $region31: #{tpu_custom_call.1} parent=1 // pred_check_branch
      %71 = sbr.rel (0) target = $region33
    $region32: #{tpu_custom_call.1} parent=1 // pred_region
      %72 = dma.done [#allocation8], 1024
    $region33: #{tpu_custom_call.1} parent=1 // pred_fallthru
      _
    // Predicated region
    $region34: #{tpu_custom_call.1} parent=1 // pred_check
      _
    $region35: #{tpu_custom_call.1} parent=1 // pred_check_branch
      %74 = sbr.rel (0) target = $region37
    $region36: #{tpu_custom_call.1} parent=1 // pred_region
      %75 = dma.done [#allocation8], 1024
    $region37: #{tpu_custom_call.1} parent=1 // pred_fallthru
      _
    // Predicated region
    $region38: #{tpu_custom_call.1} parent=1 // pred_check
      _
    $region39: #{tpu_custom_call.1} parent=1 // pred_check_branch
      %77 = sbr.rel (0) target = $region41
    $region40: #{tpu_custom_call.1} parent=1 // pred_region
      %78 = dma.done [#allocation11], 1024
    $region41: #{tpu_custom_call.1} parent=1 // pred_fallthru
      _
    %p80 = scmp.eq.s32.totalorder 0, 0
    // Predicated region
    $region42: #{tpu_custom_call.1} parent=1 // pred_check
      %p81 = pneg %p80
    $region43: #{tpu_custom_call.1} parent=1 // pred_check_branch
      %83 = sbr.rel (%p81) target = $region45
    $region44: #{tpu_custom_call.1} parent=1 // pred_region
      %84 = vst [vmem:[#allocation2] sm:$0xff] 0.0
      %85 = vst [vmem:[#allocation2 + $0x8] sm:$0xff] 0.0
    $region45: #{tpu_custom_call.1} parent=1 // pred_fallthru
      _
    %v86 = vld [vmem:[#allocation4] sm:$0xf]
    %v87 = vld [vmem:[#allocation4 + $0x4] sm:$0xf]
    %v88 = vld [vmem:[#allocation4 + $0x8] sm:$0xf]
    %v89 = vld [vmem:[#allocation4 + $0xc] sm:$0xf]
    %v90 = vld [vmem:[#allocation4 + $0x10] sm:$0xf]
    %v91 = vld [vmem:[#allocation4 + $0x14] sm:$0xf]
    %v92 = vld [vmem:[#allocation4 + $0x18] sm:$0xf]
    %v93 = vld [vmem:[#allocation4 + $0x1c] sm:$0xf]
    %v94 = vld [vmem:[#allocation4 + $0x20] sm:$0xf]
    %v95 = vld [vmem:[#allocation4 + $0x24] sm:$0xf]
    %v96 = vld [vmem:[#allocation4 + $0x28] sm:$0xf]
    %v97 = vld [vmem:[#allocation4 + $0x2c] sm:$0xf]
    %v98 = vld [vmem:[#allocation4 + $0x30] sm:$0xf]
    %v99 = vld [vmem:[#allocation4 + $0x34] sm:$0xf]
    %v100 = vld [vmem:[#allocation4 + $0x38] sm:$0xf]
    %v101 = vld [vmem:[#allocation4 + $0x3c] sm:$0xf]
    %v102 = vld [vmem:[#allocation4 + $0x40] sm:$0xf]
    %v103 = vld [vmem:[#allocation4 + $0x44] sm:$0xf]
    %v104 = vld [vmem:[#allocation4 + $0x48] sm:$0xf]
    %v105 = vld [vmem:[#allocation4 + $0x4c] sm:$0xf]
    %v106 = vld [vmem:[#allocation4 + $0x50] sm:$0xf]
    %v107 = vld [vmem:[#allocation4 + $0x54] sm:$0xf]
    %v108 = vld [vmem:[#allocation4 + $0x58] sm:$0xf]
    %v109 = vld [vmem:[#allocation4 + $0x5c] sm:$0xf]
    %v110 = vld [vmem:[#allocation4 + $0x60] sm:$0xf]
    %v111 = vld [vmem:[#allocation4 + $0x64] sm:$0xf]
    %v112 = vld [vmem:[#allocation4 + $0x68] sm:$0xf]
    %v113 = vld [vmem:[#allocation4 + $0x6c] sm:$0xf]
    %v114 = vld [vmem:[#allocation4 + $0x70] sm:$0xf]
    %v115 = vld [vmem:[#allocation4 + $0x74] sm:$0xf]
    %v116 = vld [vmem:[#allocation4 + $0x78] sm:$0xf]
    %v117 = vld [vmem:[#allocation4 + $0x7c] sm:$0xf]
    %v118 = vld [vmem:[#allocation7] sm:$0xf]
    %v119 = vld [vmem:[#allocation7 + $0x4] sm:$0xf]
    %v120 = vld [vmem:[#allocation7 + $0x8] sm:$0xf]
    %v121 = vld [vmem:[#allocation7 + $0xc] sm:$0xf]
    %v122 = vld [vmem:[#allocation7 + $0x10] sm:$0xf]
    %v123 = vld [vmem:[#allocation7 + $0x14] sm:$0xf]
    %v124 = vld [vmem:[#allocation7 + $0x18] sm:$0xf]
    %v125 = vld [vmem:[#allocation7 + $0x1c] sm:$0xf]
    %v126 = vld [vmem:[#allocation7 + $0x20] sm:$0xf]
    %v127 = vld [vmem:[#allocation7 + $0x24] sm:$0xf]
    %v128 = vld [vmem:[#allocation7 + $0x28] sm:$0xf]
    %v129 = vld [vmem:[#allocation7 + $0x2c] sm:$0xf]
    %v130 = vld [vmem:[#allocation7 + $0x30] sm:$0xf]
    %v131 = vld [vmem:[#allocation7 + $0x34] sm:$0xf]
    %v132 = vld [vmem:[#allocation7 + $0x38] sm:$0xf]
    %v133 = vld [vmem:[#allocation7 + $0x3c] sm:$0xf]
    %v134 = vld [vmem:[%s3] sm:$0x1]
    %v136 = vlaneseq
    %v137 = vshrl.u32 %v136, 7
    %v138 = vsub.s32 0, %v137
    %v139 = vrot.slane %v134, %v138
    %v173 = vunpack.c.l.b16 %v86
    %v174 = vunpack.c.l.b16 %v87
    %v175 = vunpack.c.l.b16 %v88
    %v176 = vunpack.c.l.b16 %v89
    %v177 = vunpack.c.l.b16 %v90
    %v178 = vunpack.c.l.b16 %v91
    %v179 = vunpack.c.l.b16 %v92
    %v180 = vunpack.c.l.b16 %v93
    %v181 = vunpack.c.l.b16 %v94
    %v182 = vunpack.c.l.b16 %v95
    %v183 = vunpack.c.l.b16 %v96
    %v184 = vunpack.c.l.b16 %v97
    %v185 = vunpack.c.l.b16 %v98
    %v186 = vunpack.c.l.b16 %v99
    %v187 = vunpack.c.l.b16 %v100
    %v188 = vunpack.c.l.b16 %v101
    %v189 = vunpack.c.l.b16 %v102
    %v190 = vunpack.c.l.b16 %v103
    %v191 = vunpack.c.l.b16 %v104
    %v192 = vunpack.c.l.b16 %v105
    %v193 = vunpack.c.l.b16 %v106
    %v194 = vunpack.c.l.b16 %v107
    %v195 = vunpack.c.l.b16 %v108
    %v196 = vunpack.c.l.b16 %v109
    %v197 = vunpack.c.l.b16 %v110
    %v198 = vunpack.c.l.b16 %v111
    %v199 = vunpack.c.l.b16 %v112
    %v200 = vunpack.c.l.b16 %v113
    %v201 = vunpack.c.l.b16 %v114
    %v202 = vunpack.c.l.b16 %v115
    %v203 = vunpack.c.l.b16 %v116
    %v204 = vunpack.c.l.b16 %v117
    %v205 = vpack.c.b16 %v174, %v173
    %v206 = vpack.c.b16 %v176, %v175
    %v207 = vpack.c.b16 %v178, %v177
    %v208 = vpack.c.b16 %v180, %v179
    %v209 = vpack.c.b16 %v182, %v181
    %v210 = vpack.c.b16 %v184, %v183
    %v211 = vpack.c.b16 %v186, %v185
    %v212 = vpack.c.b16 %v188, %v187
    %v213 = vpack.c.b16 %v190, %v189
    %v214 = vpack.c.b16 %v192, %v191
    %v215 = vpack.c.b16 %v194, %v193
    %v216 = vpack.c.b16 %v196, %v195
    %v217 = vpack.c.b16 %v198, %v197
    %v218 = vpack.c.b16 %v200, %v199
    %v219 = vpack.c.b16 %v202, %v201
    %v220 = vpack.c.b16 %v204, %v203
    %v253 = vunpack.c.l.b16 %v118
    %v254 = vunpack.c.l.b16 %v119
    %v255 = vunpack.c.l.b16 %v120
    %v256 = vunpack.c.l.b16 %v121
    %v257 = vunpack.c.l.b16 %v122
    %v258 = vunpack.c.l.b16 %v123
    %v259 = vunpack.c.l.b16 %v124
    %v260 = vunpack.c.l.b16 %v125
    %v261 = vunpack.c.l.b16 %v126
    %v262 = vunpack.c.l.b16 %v127
    %v263 = vunpack.c.l.b16 %v128
    %v264 = vunpack.c.l.b16 %v129
    %v265 = vunpack.c.l.b16 %v130
    %v266 = vunpack.c.l.b16 %v131
    %v267 = vunpack.c.l.b16 %v132
    %v268 = vunpack.c.l.b16 %v133
    %v269 = vpack.c.b16 %v254, %v253
    %v270 = vpack.c.b16 %v256, %v255
    %v271 = vpack.c.b16 %v258, %v257
    %v272 = vpack.c.b16 %v260, %v259
    %v273 = vpack.c.b16 %v262, %v261
    %v274 = vpack.c.b16 %v264, %v263
    %v275 = vpack.c.b16 %v266, %v265
    %v276 = vpack.c.b16 %v268, %v267
    %285 = vmatprep.subr.bf16.mxu0 0
    %286 = vmatpush1.bf16.msra.mxu0 %v269
    %287 = vmatprep.subr.bf16.mxu0 0
    %288 = vmatpush1.bf16.msra.mxu0 %v270
    %289 = vmatprep.subr.bf16.mxu0 0
    %290 = vmatpush1.bf16.msra.mxu0 %v271
    %291 = vmatprep.subr.bf16.mxu0 0
    %292 = vmatpush1.bf16.msra.mxu0 %v272
    %293 = vmatprep.subr.bf16.mxu0 0
    %294 = vmatpush1.bf16.msra.mxu0 %v273
    %295 = vmatprep.subr.bf16.mxu0 0
    %296 = vmatpush1.bf16.msra.mxu0 %v274
    %297 = vmatprep.subr.bf16.mxu0 0
    %298 = vmatpush1.bf16.msra.mxu0 %v275
    %299 = vmatprep.subr.bf16.mxu0 0
    %300 = vmatpush1.bf16.msra.mxu0 %v276
    %301 = vmatprep.subr.bf16.mxu0 0
    %302 = vmatpush1.bf16.msra.mxu0 0
    %303 = vmatprep.subr.bf16.mxu0 0
    %304 = vmatpush1.bf16.msra.mxu0 0
    %305 = vmatprep.subr.bf16.mxu0 0
    %306 = vmatpush1.bf16.msra.mxu0 0
    %307 = vmatprep.subr.bf16.mxu0 0
    %308 = vmatpush1.bf16.msra.mxu0 0
    %309 = vmatprep.subr.bf16.mxu0 0
    %310 = vmatpush1.bf16.msra.mxu0 0
    %311 = vmatprep.subr.bf16.mxu0 0
    %312 = vmatpush1.bf16.msra.mxu0 0
    %313 = vmatprep.subr.bf16.mxu0 0
    %314 = vmatpush1.bf16.msra.mxu0 0
    %315 = vmatprep.subr.bf16.mxu0 0
    %316 = vmatpush1.bf16.msra.mxu0 0
    %317 = vmatprep.mubr.bf16.mxu0 0
    %318 = vmatmul.mubr.bf16.gmra.mrb[0].mxu0 %v205
    %v319 = vpop.f32.mrb[0].mxu0
    %v320 = vadd.f32 %v139, %v319
    %v321 = vpop.f32.mrb[0].mxu0
    %v322 = vpop.f32.mrb[0].mxu0
    %v323 = vadd.f32 %v139, %v322
    %v324 = vpop.f32.mrb[0].mxu0
    %325 = vmatprep.mubr.bf16.mxu0 0
    %326 = vmatmul.mubr.bf16.gmra.mrb[0].mxu0 %v206
    %v327 = vpop.f32.mrb[0].mxu0
    %v328 = vadd.f32 %v139, %v327
    %v329 = vpop.f32.mrb[0].mxu0
    %v330 = vpop.f32.mrb[0].mxu0
    %v331 = vadd.f32 %v139, %v330
    %v332 = vpop.f32.mrb[0].mxu0
    %333 = vmatprep.mubr.bf16.mxu0 0
    %334 = vmatmul.mubr.bf16.gmra.mrb[0].mxu0 %v207
    %v335 = vpop.f32.mrb[0].mxu0
    %v336 = vadd.f32 %v139, %v335
    %v337 = vpop.f32.mrb[0].mxu0
    %v338 = vpop.f32.mrb[0].mxu0
    %v339 = vadd.f32 %v139, %v338
    %v340 = vpop.f32.mrb[0].mxu0
    %341 = vmatprep.mubr.bf16.mxu0 0
    %342 = vmatmul.mubr.bf16.gmra.mrb[0].mxu0 %v208
    %v343 = vpop.f32.mrb[0].mxu0
    %v344 = vadd.f32 %v139, %v343
    %v345 = vpop.f32.mrb[0].mxu0
    %v346 = vpop.f32.mrb[0].mxu0
    %v347 = vadd.f32 %v139, %v346
    %v348 = vpop.f32.mrb[0].mxu0
    %349 = vmatprep.mubr.bf16.mxu0 0
    %350 = vmatmul.mubr.bf16.gmra.mrb[0].mxu0 %v209
    %v351 = vpop.f32.mrb[0].mxu0
    %v352 = vadd.f32 %v139, %v351
    %v353 = vpop.f32.mrb[0].mxu0
    %v354 = vpop.f32.mrb[0].mxu0
    %v355 = vadd.f32 %v139, %v354
    %v356 = vpop.f32.mrb[0].mxu0
    %357 = vmatprep.mubr.bf16.mxu0 0
    %358 = vmatmul.mubr.bf16.gmra.mrb[0].mxu0 %v210
    %v359 = vpop.f32.mrb[0].mxu0
    %v360 = vadd.f32 %v139, %v359
    %v361 = vpop.f32.mrb[0].mxu0
    %v362 = vpop.f32.mrb[0].mxu0
    %v363 = vadd.f32 %v139, %v362
    %v364 = vpop.f32.mrb[0].mxu0
    %365 = vmatprep.mubr.bf16.mxu0 0
    %366 = vmatmul.mubr.bf16.gmra.mrb[0].mxu0 %v211
    %v367 = vpop.f32.mrb[0].mxu0
    %v368 = vadd.f32 %v139, %v367
    %v369 = vpop.f32.mrb[0].mxu0
    %v370 = vpop.f32.mrb[0].mxu0
    %v371 = vadd.f32 %v139, %v370
    %v372 = vpop.f32.mrb[0].mxu0
    %373 = vmatprep.mubr.bf16.mxu0 0
    %374 = vmatmul.mubr.bf16.gmra.mrb[0].mxu0 %v212
    %v375 = vpop.f32.mrb[0].mxu0
    %v376 = vadd.f32 %v139, %v375
    %v377 = vpop.f32.mrb[0].mxu0
    %v378 = vpop.f32.mrb[0].mxu0
    %v379 = vadd.f32 %v139, %v378
    %v380 = vpop.f32.mrb[0].mxu0
    %381 = vmatprep.mubr.bf16.mxu0 0
    %382 = vmatmul.mubr.bf16.gmra.mrb[0].mxu0 %v213
    %v383 = vpop.f32.mrb[0].mxu0
    %v384 = vadd.f32 %v139, %v383
    %v385 = vpop.f32.mrb[0].mxu0
    %v386 = vpop.f32.mrb[0].mxu0
    %v387 = vadd.f32 %v139, %v386
    %v388 = vpop.f32.mrb[0].mxu0
    %389 = vmatprep.mubr.bf16.mxu0 0
    %390 = vmatmul.mubr.bf16.gmra.mrb[0].mxu0 %v214
    %v391 = vpop.f32.mrb[0].mxu0
    %v392 = vadd.f32 %v139, %v391
    %v393 = vpop.f32.mrb[0].mxu0
    %v394 = vpop.f32.mrb[0].mxu0
    %v395 = vadd.f32 %v139, %v394
    %v396 = vpop.f32.mrb[0].mxu0
    %397 = vmatprep.mubr.bf16.mxu0 0
    %398 = vmatmul.mubr.bf16.gmra.mrb[0].mxu0 %v215
    %v399 = vpop.f32.mrb[0].mxu0
    %v400 = vadd.f32 %v139, %v399
    %v401 = vpop.f32.mrb[0].mxu0
    %v402 = vpop.f32.mrb[0].mxu0
    %v403 = vadd.f32 %v139, %v402
    %v404 = vpop.f32.mrb[0].mxu0
    %405 = vmatprep.mubr.bf16.mxu0 0
    %406 = vmatmul.mubr.bf16.gmra.mrb[0].mxu0 %v216
    %v407 = vpop.f32.mrb[0].mxu0
    %v408 = vadd.f32 %v139, %v407
    %v409 = vpop.f32.mrb[0].mxu0
    %v410 = vpop.f32.mrb[0].mxu0
    %v411 = vadd.f32 %v139, %v410
    %v412 = vpop.f32.mrb[0].mxu0
    %413 = vmatprep.mubr.bf16.mxu0 0
    %414 = vmatmul.mubr.bf16.gmra.mrb[0].mxu0 %v217
    %v415 = vpop.f32.mrb[0].mxu0
    %v416 = vadd.f32 %v139, %v415
    %v417 = vpop.f32.mrb[0].mxu0
    %v418 = vpop.f32.mrb[0].mxu0
    %v419 = vadd.f32 %v139, %v418
    %v420 = vpop.f32.mrb[0].mxu0
    %421 = vmatprep.mubr.bf16.mxu0 0
    %422 = vmatmul.mubr.bf16.gmra.mrb[0].mxu0 %v218
    %v423 = vpop.f32.mrb[0].mxu0
    %v424 = vadd.f32 %v139, %v423
    %v425 = vpop.f32.mrb[0].mxu0
    %v426 = vpop.f32.mrb[0].mxu0
    %v427 = vadd.f32 %v139, %v426
    %v428 = vpop.f32.mrb[0].mxu0
    %429 = vmatprep.mubr.bf16.mxu0 0
    %430 = vmatmul.mubr.bf16.gmra.mrb[0].mxu0 %v219
    %v431 = vpop.f32.mrb[0].mxu0
    %v432 = vadd.f32 %v139, %v431
    %v433 = vpop.f32.mrb[0].mxu0
    %v434 = vpop.f32.mrb[0].mxu0
    %v435 = vadd.f32 %v139, %v434
    %v436 = vpop.f32.mrb[0].mxu0
    %437 = vmatprep.mubr.bf16.mxu0 0
    %438 = vmatmul.mubr.bf16.gmra.mrb[0].mxu0 %v220
    %v439 = vpop.f32.mrb[0].mxu0
    %v440 = vadd.f32 %v139, %v439
    %v441 = vpop.f32.mrb[0].mxu0
    %v442 = vpop.f32.mrb[0].mxu0
    %v443 = vadd.f32 %v139, %v442
    %v444 = vpop.f32.mrb[0].mxu0
    %445 = vdwg.mxu0
    %v462 = vrot.slane %v328, 7
    %vm463 = vcmask 1041409
    %v464 = vsel %vm463, %v462, %v320
    %v465 = vrot.slane %v336, 6
    %vm466 = vcmask 1042434
    %v467 = vsel %vm466, %v465, %v464
    %v468 = vrot.slane %v344, 5
    %vm469 = vcmask 1043459
    %v470 = vsel %vm469, %v468, %v467
    %v471 = vrot.slane %v352, 4
    %vm472 = vcmask 1044484
    %v473 = vsel %vm472, %v471, %v470
    %v474 = vrot.slane %v360, 3
    %vm475 = vcmask 1045509
    %v476 = vsel %vm475, %v474, %v473
    %v477 = vrot.slane %v368, 2
    %vm478 = vcmask 1046534
    %v479 = vsel %vm478, %v477, %v476
    %v480 = vrot.slane %v376, 1
    %vm481 = vcmask 1047559
    %v482 = vsel %vm481, %v480, %v479
    %v483 = vrot.slane %v392, 7
    %v484 = vsel %vm463, %v483, %v384
    %v485 = vrot.slane %v400, 6
    %v486 = vsel %vm466, %v485, %v484
    %v487 = vrot.slane %v408, 5
    %v488 = vsel %vm469, %v487, %v486
    %v489 = vrot.slane %v416, 4
    %v490 = vsel %vm472, %v489, %v488
    %v491 = vrot.slane %v424, 3
    %v492 = vsel %vm475, %v491, %v490
    %v493 = vrot.slane %v432, 2
    %v494 = vsel %vm478, %v493, %v492
    %v495 = vrot.slane %v440, 1
    %v496 = vsel %vm481, %v495, %v494
    %499 = vst [vmem:[#allocation3] sm:$0xff] %v482
    %500 = vst [vmem:[#allocation3 + $0x8] sm:$0xff] %v496
    %v501 = vsel %vm466, %v462, %v320
    %v502 = vsel %vm469, %v465, %v501
    %v503 = vsel %vm472, %v468, %v502
    %v504 = vsel %vm475, %v471, %v503
    %v505 = vsel %vm478, %v474, %v504
    %v506 = vsel %vm481, %v477, %v505
    %v507 = vsel %vm463, %v384, %v480
    %v508 = vsel %vm466, %v483, %v507
    %v509 = vsel %vm469, %v485, %v508
    %v510 = vsel %vm472, %v487, %v509
    %v511 = vsel %vm475, %v489, %v510
    %v512 = vsel %vm478, %v491, %v511
    %v513 = vsel %vm481, %v493, %v512
    %s517 = scalar_lea.vmem [#allocation3], 16
    %518 = vst [vmem:[%s517 - $0x1] sm:$0xfe] %v506
    %519 = vst [vmem:[%s517 + $0x7] sm:$0xff] %v513
    %520 = vst [vmem:[%s517 + $0xf] sm:$0x1] %v495
    %v521 = vsel %vm469, %v462, %v320
    %v522 = vsel %vm472, %v465, %v521
    %v523 = vsel %vm475, %v468, %v522
    %v524 = vsel %vm478, %v471, %v523
    %v525 = vsel %vm481, %v474, %v524
    %v526 = vsel %vm463, %v480, %v477
    %v527 = vsel %vm466, %v384, %v526
    %v528 = vsel %vm469, %v483, %v527
    %v529 = vsel %vm472, %v485, %v528
    %v530 = vsel %vm475, %v487, %v529
    %v531 = vsel %vm478, %v489, %v530
    %v532 = vsel %vm481, %v491, %v531
    %v533 = vsel %vm463, %v495, %v493
    %s537 = scalar_lea.vmem [#allocation3], 32
    %538 = vst [vmem:[%s537 - $0x2] sm:$0xfc] %v525
    %539 = vst [vmem:[%s537 + $0x6] sm:$0xff] %v532
    %540 = vst [vmem:[%s537 + $0xe] sm:$0x3] %v533
    %v541 = vsel %vm472, %v462, %v320
    %v542 = vsel %vm475, %v465, %v541
    %v543 = vsel %vm478, %v468, %v542
    %v544 = vsel %vm481, %v471, %v543
    %v545 = vsel %vm463, %v477, %v474
    %v546 = vsel %vm466, %v480, %v545
    %v547 = vsel %vm469, %v384, %v546
    %v548 = vsel %vm472, %v483, %v547
    %v549 = vsel %vm475, %v485, %v548
    %v550 = vsel %vm478, %v487, %v549
    %v551 = vsel %vm481, %v489, %v550
    %v552 = vsel %vm463, %v493, %v491
    %v553 = vsel %vm466, %v495, %v552
    %s557 = scalar_lea.vmem [#allocation3], 48
    %558 = vst [vmem:[%s557 - $0x3] sm:$0xf8] %v544
    %559 = vst [vmem:[%s557 + $0x5] sm:$0xff] %v551
    %560 = vst [vmem:[%s557 + $0xd] sm:$0x7] %v553
    %v561 = vsel %vm475, %v462, %v320
    %v562 = vsel %vm478, %v465, %v561
    %v563 = vsel %vm481, %v468, %v562
    %v564 = vsel %vm463, %v474, %v471
    %v565 = vsel %vm466, %v477, %v564
    %v566 = vsel %vm469, %v480, %v565
    %v567 = vsel %vm472, %v384, %v566
    %v568 = vsel %vm475, %v483, %v567
    %v569 = vsel %vm478, %v485, %v568
    %v570 = vsel %vm481, %v487, %v569
    %v571 = vsel %vm463, %v491, %v489
    %v572 = vsel %vm466, %v493, %v571
    %v573 = vsel %vm469, %v495, %v572
    %s577 = scalar_lea.vmem [#allocation3], 64
    %578 = vst [vmem:[%s577 - $0x4] sm:$0xf0] %v563
    %579 = vst [vmem:[%s577 + $0x4] sm:$0xff] %v570
    %580 = vst [vmem:[%s577 + $0xc] sm:$0xf] %v573
    %v581 = vsel %vm478, %v462, %v320
    %v582 = vsel %vm481, %v465, %v581
    %v583 = vsel %vm463, %v471, %v468
    %v584 = vsel %vm466, %v474, %v583
    %v585 = vsel %vm469, %v477, %v584
    %v586 = vsel %vm472, %v480, %v585
    %v587 = vsel %vm475, %v384, %v586
    %v588 = vsel %vm478, %v483, %v587
    %v589 = vsel %vm481, %v485, %v588
    %v590 = vsel %vm463, %v489, %v487
    %v591 = vsel %vm466, %v491, %v590
    %v592 = vsel %vm469, %v493, %v591
    %v593 = vsel %vm472, %v495, %v592
    %s597 = scalar_lea.vmem [#allocation3], 80
    %598 = vst [vmem:[%s597 - $0x5] sm:$0xe0] %v582
    %599 = vst [vmem:[%s597 + $0x3] sm:$0xff] %v589
    %600 = vst [vmem:[%s597 + $0xb] sm:$0x1f] %v593
    %v601 = vsel %vm481, %v462, %v320
    %v602 = vsel %vm463, %v468, %v465
    %v603 = vsel %vm466, %v471, %v602
    %v604 = vsel %vm469, %v474, %v603
    %v605 = vsel %vm472, %v477, %v604
    %v606 = vsel %vm475, %v480, %v605
    %v607 = vsel %vm478, %v384, %v606
    %v608 = vsel %vm481, %v483, %v607
    %v609 = vsel %vm463, %v487, %v485
    %v610 = vsel %vm466, %v489, %v609
    %v611 = vsel %vm469, %v491, %v610
    %v612 = vsel %vm472, %v493, %v611
    %v613 = vsel %vm475, %v495, %v612
    %s617 = scalar_lea.vmem [#allocation3], 96
    %618 = vst [vmem:[%s617 - $0x6] sm:$0xc0] %v601
    %619 = vst [vmem:[%s617 + $0x2] sm:$0xff] %v608
    %620 = vst [vmem:[%s617 + $0xa] sm:$0x3f] %v613
    %v621 = vsel %vm463, %v465, %v462
    %v622 = vsel %vm466, %v468, %v621
    %v623 = vsel %vm469, %v471, %v622
    %v624 = vsel %vm472, %v474, %v623
    %v625 = vsel %vm475, %v477, %v624
    %v626 = vsel %vm478, %v480, %v625
    %v627 = vsel %vm481, %v384, %v626
    %v628 = vsel %vm463, %v485, %v483
    %v629 = vsel %vm466, %v487, %v628
    %v630 = vsel %vm469, %v489, %v629
    %v631 = vsel %vm472, %v491, %v630
    %v632 = vsel %vm475, %v493, %v631
    %v633 = vsel %vm478, %v495, %v632
    %s637 = scalar_lea.vmem [#allocation3], 112
    %638 = vst [vmem:[%s637 - $0x7] sm:$0x80] %v320
    %639 = vst [vmem:[%s637 + $0x1] sm:$0xff] %v627
    %640 = vst [vmem:[%s637 + $0x9] sm:$0x7f] %v633
    %v657 = vrot.slane %v331, 7
    %v658 = vsel %vm463, %v657, %v323
    %v659 = vrot.slane %v339, 6
    %v660 = vsel %vm466, %v659, %v658
    %v661 = vrot.slane %v347, 5
    %v662 = vsel %vm469, %v661, %v660
    %v663 = vrot.slane %v355, 4
    %v664 = vsel %vm472, %v663, %v662
    %v665 = vrot.slane %v363, 3
    %v666 = vsel %vm475, %v665, %v664
    %v667 = vrot.slane %v371, 2
    %v668 = vsel %vm478, %v667, %v666
    %v669 = vrot.slane %v379, 1
    %v670 = vsel %vm481, %v669, %v668
    %v671 = vrot.slane %v395, 7
    %v672 = vsel %vm463, %v671, %v387
    %v673 = vrot.slane %v403, 6
    %v674 = vsel %vm466, %v673, %v672
    %v675 = vrot.slane %v411, 5
    %v676 = vsel %vm469, %v675, %v674
    %v677 = vrot.slane %v419, 4
    %v678 = vsel %vm472, %v677, %v676
    %v679 = vrot.slane %v427, 3
    %v680 = vsel %vm475, %v679, %v678
    %v681 = vrot.slane %v435, 2
    %v682 = vsel %vm478, %v681, %v680
    %v683 = vrot.slane %v443, 1
    %v684 = vsel %vm481, %v683, %v682
    %s687 = scalar_lea.vmem [#allocation3], 128
    %688 = vst [vmem:[%s687] sm:$0xff] %v670
    %689 = vst [vmem:[%s687 + $0x8] sm:$0xff] %v684
    %v690 = vsel %vm466, %v657, %v323
    %v691 = vsel %vm469, %v659, %v690
    %v692 = vsel %vm472, %v661, %v691
    %v693 = vsel %vm475, %v663, %v692
    %v694 = vsel %vm478, %v665, %v693
    %v695 = vsel %vm481, %v667, %v694
    %v696 = vsel %vm463, %v387, %v669
    %v697 = vsel %vm466, %v671, %v696
    %v698 = vsel %vm469, %v673, %v697
    %v699 = vsel %vm472, %v675, %v698
    %v700 = vsel %vm475, %v677, %v699
    %v701 = vsel %vm478, %v679, %v700
    %v702 = vsel %vm481, %v681, %v701
    %s706 = scalar_lea.vmem [#allocation3], 144
    %707 = vst [vmem:[%s706 - $0x1] sm:$0xfe] %v695
    %708 = vst [vmem:[%s706 + $0x7] sm:$0xff] %v702
    %709 = vst [vmem:[%s706 + $0xf] sm:$0x1] %v683
    %v710 = vsel %vm469, %v657, %v323
    %v711 = vsel %vm472, %v659, %v710
    %v712 = vsel %vm475, %v661, %v711
    %v713 = vsel %vm478, %v663, %v712
    %v714 = vsel %vm481, %v665, %v713
    %v715 = vsel %vm463, %v669, %v667
    %v716 = vsel %vm466, %v387, %v715
    %v717 = vsel %vm469, %v671, %v716
    %v718 = vsel %vm472, %v673, %v717
    %v719 = vsel %vm475, %v675, %v718
    %v720 = vsel %vm478, %v677, %v719
    %v721 = vsel %vm481, %v679, %v720
    %v722 = vsel %vm463, %v683, %v681
    %s726 = scalar_lea.vmem [#allocation3], 160
    %727 = vst [vmem:[%s726 - $0x2] sm:$0xfc] %v714
    %728 = vst [vmem:[%s726 + $0x6] sm:$0xff] %v721
    %729 = vst [vmem:[%s726 + $0xe] sm:$0x3] %v722
    %v730 = vsel %vm472, %v657, %v323
    %v731 = vsel %vm475, %v659, %v730
    %v732 = vsel %vm478, %v661, %v731
    %v733 = vsel %vm481, %v663, %v732
    %v734 = vsel %vm463, %v667, %v665
    %v735 = vsel %vm466, %v669, %v734
    %v736 = vsel %vm469, %v387, %v735
    %v737 = vsel %vm472, %v671, %v736
    %v738 = vsel %vm475, %v673, %v737
    %v739 = vsel %vm478, %v675, %v738
    %v740 = vsel %vm481, %v677, %v739
    %v741 = vsel %vm463, %v681, %v679
    %v742 = vsel %vm466, %v683, %v741
    %s746 = scalar_lea.vmem [#allocation3], 176
    %747 = vst [vmem:[%s746 - $0x3] sm:$0xf8] %v733
    %748 = vst [vmem:[%s746 + $0x5] sm:$0xff] %v740
    %749 = vst [vmem:[%s746 + $0xd] sm:$0x7] %v742
    %v750 = vsel %vm475, %v657, %v323
    %v751 = vsel %vm478, %v659, %v750
    %v752 = vsel %vm481, %v661, %v751
    %v753 = vsel %vm463, %v665, %v663
    %v754 = vsel %vm466, %v667, %v753
    %v755 = vsel %vm469, %v669, %v754
    %v756 = vsel %vm472, %v387, %v755
    %v757 = vsel %vm475, %v671, %v756
    %v758 = vsel %vm478, %v673, %v757
    %v759 = vsel %vm481, %v675, %v758
    %v760 = vsel %vm463, %v679, %v677
    %v761 = vsel %vm466, %v681, %v760
    %v762 = vsel %vm469, %v683, %v761
    %s766 = scalar_lea.vmem [#allocation3], 192
    %767 = vst [vmem:[%s766 - $0x4] sm:$0xf0] %v752
    %768 = vst [vmem:[%s766 + $0x4] sm:$0xff] %v759
    %769 = vst [vmem:[%s766 + $0xc] sm:$0xf] %v762
    %v770 = vsel %vm478, %v657, %v323
    %v771 = vsel %vm481, %v659, %v770
    %v772 = vsel %vm463, %v663, %v661
    %v773 = vsel %vm466, %v665, %v772
    %v774 = vsel %vm469, %v667, %v773
    %v775 = vsel %vm472, %v669, %v774
    %v776 = vsel %vm475, %v387, %v775
    %v777 = vsel %vm478, %v671, %v776
    %v778 = vsel %vm481, %v673, %v777
    %v779 = vsel %vm463, %v677, %v675
    %v780 = vsel %vm466, %v679, %v779
    %v781 = vsel %vm469, %v681, %v780
    %v782 = vsel %vm472, %v683, %v781
    %s786 = scalar_lea.vmem [#allocation3], 208
    %787 = vst [vmem:[%s786 - $0x5] sm:$0xe0] %v771
    %788 = vst [vmem:[%s786 + $0x3] sm:$0xff] %v778
    %789 = vst [vmem:[%s786 + $0xb] sm:$0x1f] %v782
    %v790 = vsel %vm481, %v657, %v323
    %v791 = vsel %vm463, %v661, %v659
    %v792 = vsel %vm466, %v663, %v791
    %v793 = vsel %vm469, %v665, %v792
    %v794 = vsel %vm472, %v667, %v793
    %v795 = vsel %vm475, %v669, %v794
    %v796 = vsel %vm478, %v387, %v795
    %v797 = vsel %vm481, %v671, %v796
    %v798 = vsel %vm463, %v675, %v673
    %v799 = vsel %vm466, %v677, %v798
    %v800 = vsel %vm469, %v679, %v799
    %v801 = vsel %vm472, %v681, %v800
    %v802 = vsel %vm475, %v683, %v801
    %s806 = scalar_lea.vmem [#allocation3], 224
    %807 = vst [vmem:[%s806 - $0x6] sm:$0xc0] %v790
    %808 = vst [vmem:[%s806 + $0x2] sm:$0xff] %v797
    %809 = vst [vmem:[%s806 + $0xa] sm:$0x3f] %v802
    %v810 = vsel %vm463, %v659, %v657
    %v811 = vsel %vm466, %v661, %v810
    %v812 = vsel %vm469, %v663, %v811
    %v813 = vsel %vm472, %v665, %v812
    %v814 = vsel %vm475, %v667, %v813
    %v815 = vsel %vm478, %v669, %v814
    %v816 = vsel %vm481, %v387, %v815
    %v817 = vsel %vm463, %v673, %v671
    %v818 = vsel %vm466, %v675, %v817
    %v819 = vsel %vm469, %v677, %v818
    %v820 = vsel %vm472, %v679, %v819
    %v821 = vsel %vm475, %v681, %v820
    %v822 = vsel %vm478, %v683, %v821
    %s826 = scalar_lea.vmem [#allocation3], 240
    %827 = vst [vmem:[%s826 - $0x7] sm:$0x80] %v323
    %828 = vst [vmem:[%s826 + $0x1] sm:$0xff] %v816
    %829 = vst [vmem:[%s826 + $0x9] sm:$0x7f] %v822
    %v830 = vld [vmem:[#allocation9] sm:$0xf]
    %v831 = vld [vmem:[#allocation9 + $0x4] sm:$0xf]
    %v832 = vld [vmem:[#allocation9 + $0x8] sm:$0xf]
    %v833 = vld [vmem:[#allocation9 + $0xc] sm:$0xf]
    %v834 = vld [vmem:[#allocation9 + $0x10] sm:$0xf]
    %v835 = vld [vmem:[#allocation9 + $0x14] sm:$0xf]
    %v836 = vld [vmem:[#allocation9 + $0x18] sm:$0xf]
    %v837 = vld [vmem:[#allocation9 + $0x1c] sm:$0xf]
    %v838 = vld [vmem:[#allocation9 + $0x20] sm:$0xf]
    %v839 = vld [vmem:[#allocation9 + $0x24] sm:$0xf]
    %v840 = vld [vmem:[#allocation9 + $0x28] sm:$0xf]
    %v841 = vld [vmem:[#allocation9 + $0x2c] sm:$0xf]
    %v842 = vld [vmem:[#allocation9 + $0x30] sm:$0xf]
    %v843 = vld [vmem:[#allocation9 + $0x34] sm:$0xf]
    %v844 = vld [vmem:[#allocation9 + $0x38] sm:$0xf]
    %v845 = vld [vmem:[#allocation9 + $0x3c] sm:$0xf]
    %s846 = smul.u32 0, 16
    %v847 = vld [vmem:[#allocation2] sm:$0xff]
    %v848 = vld [vmem:[#allocation2 + $0x8] sm:$0xff]
    %v849 = vld [vmem:[#allocation3] sm:$0xff]
    %v850 = vld [vmem:[#allocation3 + $0x8] sm:$0xff]
    %v851 = vpack.c.bf16 %v848, %v847
    %v868 = vunpack.c.l.b16 %v830
    %v869 = vunpack.c.l.b16 %v831
    %v870 = vunpack.c.l.b16 %v832
    %v871 = vunpack.c.l.b16 %v833
    %v872 = vunpack.c.l.b16 %v834
    %v873 = vunpack.c.l.b16 %v835
    %v874 = vunpack.c.l.b16 %v836
    %v875 = vunpack.c.l.b16 %v837
    %v876 = vunpack.c.l.b16 %v838
    %v877 = vunpack.c.l.b16 %v839
    %v878 = vunpack.c.l.b16 %v840
    %v879 = vunpack.c.l.b16 %v841
    %v880 = vunpack.c.l.b16 %v842
    %v881 = vunpack.c.l.b16 %v843
    %v882 = vunpack.c.l.b16 %v844
    %v883 = vunpack.c.l.b16 %v845
    %v884 = vpack.c.b16 %v869, %v868
    %v885 = vpack.c.b16 %v871, %v870
    %v886 = vpack.c.b16 %v873, %v872
    %v887 = vpack.c.b16 %v875, %v874
    %v888 = vpack.c.b16 %v877, %v876
    %v889 = vpack.c.b16 %v879, %v878
    %v890 = vpack.c.b16 %v881, %v880
    %v891 = vpack.c.b16 %v883, %v882
    %900 = vmatprep.subr.bf16.mxu0 0
    %901 = vmatpush1.bf16.msra.mxu0 %v884
    %902 = vmatprep.subr.bf16.mxu0 0
    %903 = vmatpush1.bf16.msra.mxu0 %v885
    %904 = vmatprep.subr.bf16.mxu0 0
    %905 = vmatpush1.bf16.msra.mxu0 %v886
    %906 = vmatprep.subr.bf16.mxu0 0
    %907 = vmatpush1.bf16.msra.mxu0 %v887
    %908 = vmatprep.subr.bf16.mxu0 0
    %909 = vmatpush1.bf16.msra.mxu0 %v888
    %910 = vmatprep.subr.bf16.mxu0 0
    %911 = vmatpush1.bf16.msra.mxu0 %v889
    %912 = vmatprep.subr.bf16.mxu0 0
    %913 = vmatpush1.bf16.msra.mxu0 %v890
    %914 = vmatprep.subr.bf16.mxu0 0
    %915 = vmatpush1.bf16.msra.mxu0 %v891
    %916 = vmatprep.subr.bf16.mxu0 0
    %917 = vmatpush1.bf16.msra.mxu0 0
    %918 = vmatprep.subr.bf16.mxu0 0
    %919 = vmatpush1.bf16.msra.mxu0 0
    %920 = vmatprep.subr.bf16.mxu0 0
    %921 = vmatpush1.bf16.msra.mxu0 0
    %922 = vmatprep.subr.bf16.mxu0 0
    %923 = vmatpush1.bf16.msra.mxu0 0
    %924 = vmatprep.subr.bf16.mxu0 0
    %925 = vmatpush1.bf16.msra.mxu0 0
    %926 = vmatprep.subr.bf16.mxu0 0
    %927 = vmatpush1.bf16.msra.mxu0 0
    %928 = vmatprep.subr.bf16.mxu0 0
    %929 = vmatpush1.bf16.msra.mxu0 0
    %930 = vmatprep.subr.bf16.mxu0 0
    %931 = vmatpush1.bf16.msra.mxu0 0
    %932 = vmatprep.mubr.bf16.mxu0 0
    %933 = vmatmul.mubr.bf16.gmra.mrb[0].mxu0 %v851
    %v934 = vpop.f32.mrb[0].mxu0
    %v935 = vadd.f32 0.0, %v934
    %v936 = vpop.f32.mrb[0].mxu0
    %v937 = vpop.f32.mrb[0].mxu0
    %v938 = vadd.f32 0.0, %v937
    %v939 = vpop.f32.mrb[0].mxu0
    %940 = vdwg.mxu0
    %v941 = vadd.f32 %v849, %v935
    %v942 = vadd.f32 %v850, %v938
    %v943 = vtanh.pop %v941
    %v944 = vtanh.pop %v942
    %p945 = scmp.lt.s32.totalorder %s846, 8
    %s946 = scalar_select %p945, 1, 0
    %v947 = vstv %s946
    %vm948 = vcmp.eq.s32.totalorder %v947, 1
    %v949 = vsel %vm948, %v943, %v847
    %v950 = vsel %vm948, %v944, %v848
    %v951 = vld [vmem:[%s517] sm:$0xff]
    %v952 = vld [vmem:[%s517 + $0x8] sm:$0xff]
    %v953 = vpack.c.bf16 %v950, %v949
    %954 = vmatprep.subr.bf16.mxu0 0
    %955 = vmatpush1.bf16.msra.mxu0 %v884
    %956 = vmatprep.subr.bf16.mxu0 0
    %957 = vmatpush1.bf16.msra.mxu0 %v885
    %958 = vmatprep.subr.bf16.mxu0 0
    %959 = vmatpush1.bf16.msra.mxu0 %v886
    %960 = vmatprep.subr.bf16.mxu0 0
    %961 = vmatpush1.bf16.msra.mxu0 %v887
    %962 = vmatprep.subr.bf16.mxu0 0
    %963 = vmatpush1.bf16.msra.mxu0 %v888
    %964 = vmatprep.subr.bf16.mxu0 0
    %965 = vmatpush1.bf16.msra.mxu0 %v889
    %966 = vmatprep.subr.bf16.mxu0 0
    %967 = vmatpush1.bf16.msra.mxu0 %v890
    %968 = vmatprep.subr.bf16.mxu0 0
    %969 = vmatpush1.bf16.msra.mxu0 %v891
    %970 = vmatprep.subr.bf16.mxu0 0
    %971 = vmatpush1.bf16.msra.mxu0 0
    %972 = vmatprep.subr.bf16.mxu0 0
    %973 = vmatpush1.bf16.msra.mxu0 0
    %974 = vmatprep.subr.bf16.mxu0 0
    %975 = vmatpush1.bf16.msra.mxu0 0
    %976 = vmatprep.subr.bf16.mxu0 0
    %977 = vmatpush1.bf16.msra.mxu0 0
    %978 = vmatprep.subr.bf16.mxu0 0
    %979 = vmatpush1.bf16.msra.mxu0 0
    %980 = vmatprep.subr.bf16.mxu0 0
    %981 = vmatpush1.bf16.msra.mxu0 0
    %982 = vmatprep.subr.bf16.mxu0 0
    %983 = vmatpush1.bf16.msra.mxu0 0
    %984 = vmatprep.subr.bf16.mxu0 0
    %985 = vmatpush1.bf16.msra.mxu0 0
    %986 = vmatprep.mubr.bf16.mxu0 0
    %987 = vmatmul.mubr.bf16.gmra.mrb[0].mxu0 %v953
    %v988 = vpop.f32.mrb[0].mxu0
    %v989 = vadd.f32 0.0, %v988
    %v990 = vpop.f32.mrb[0].mxu0
    %v991 = vpop.f32.mrb[0].mxu0
    %v992 = vadd.f32 0.0, %v991
    %v993 = vpop.f32.mrb[0].mxu0
    %994 = vdwg.mxu0
    %v995 = vadd.f32 %v951, %v989
    %v996 = vadd.f32 %v952, %v992
    %v997 = vtanh.pop %v995
    %v998 = vtanh.pop %v996
    %s999 = sadd.s32 %s846, 1
    %p1000 = scmp.lt.s32.totalorder %s999, 8
    %s1001 = scalar_select %p1000, 1, 0
    %v1002 = vstv %s1001
    %vm1003 = vcmp.eq.s32.totalorder %v1002, 1
    %v1004 = vsel %vm1003, %v997, %v949
    %v1005 = vsel %vm1003, %v998, %v950
    %v1006 = vld [vmem:[%s537] sm:$0xff]
    %v1007 = vld [vmem:[%s537 + $0x8] sm:$0xff]
    %v1008 = vpack.c.bf16 %v1005, %v1004
    %1009 = vmatprep.subr.bf16.mxu0 0
    %1010 = vmatpush1.bf16.msra.mxu0 %v884
    %1011 = vmatprep.subr.bf16.mxu0 0
    %1012 = vmatpush1.bf16.msra.mxu0 %v885
    %1013 = vmatprep.subr.bf16.mxu0 0
    %1014 = vmatpush1.bf16.msra.mxu0 %v886
    %1015 = vmatprep.subr.bf16.mxu0 0
    %1016 = vmatpush1.bf16.msra.mxu0 %v887
    %1017 = vmatprep.subr.bf16.mxu0 0
    %1018 = vmatpush1.bf16.msra.mxu0 %v888
    %1019 = vmatprep.subr.bf16.mxu0 0
    %1020 = vmatpush1.bf16.msra.mxu0 %v889
    %1021 = vmatprep.subr.bf16.mxu0 0
    %1022 = vmatpush1.bf16.msra.mxu0 %v890
    %1023 = vmatprep.subr.bf16.mxu0 0
    %1024 = vmatpush1.bf16.msra.mxu0 %v891
    %1025 = vmatprep.subr.bf16.mxu0 0
    %1026 = vmatpush1.bf16.msra.mxu0 0
    %1027 = vmatprep.subr.bf16.mxu0 0
    %1028 = vmatpush1.bf16.msra.mxu0 0
    %1029 = vmatprep.subr.bf16.mxu0 0
    %1030 = vmatpush1.bf16.msra.mxu0 0
    %1031 = vmatprep.subr.bf16.mxu0 0
    %1032 = vmatpush1.bf16.msra.mxu0 0
    %1033 = vmatprep.subr.bf16.mxu0 0
    %1034 = vmatpush1.bf16.msra.mxu0 0
    %1035 = vmatprep.subr.bf16.mxu0 0
    %1036 = vmatpush1.bf16.msra.mxu0 0
    %1037 = vmatprep.subr.bf16.mxu0 0
    %1038 = vmatpush1.bf16.msra.mxu0 0
    %1039 = vmatprep.subr.bf16.mxu0 0
    %1040 = vmatpush1.bf16.msra.mxu0 0
    %1041 = vmatprep.mubr.bf16.mxu0 0
    %1042 = vmatmul.mubr.bf16.gmra.mrb[0].mxu0 %v1008
    %v1043 = vpop.f32.mrb[0].mxu0
    %v1044 = vadd.f32 0.0, %v1043
    %v1045 = vpop.f32.mrb[0].mxu0
    %v1046 = vpop.f32.mrb[0].mxu0
    %v1047 = vadd.f32 0.0, %v1046
    %v1048 = vpop.f32.mrb[0].mxu0
    %1049 = vdwg.mxu0
    %v1050 = vadd.f32 %v1006, %v1044
    %v1051 = vadd.f32 %v1007, %v1047
    %v1052 = vtanh.pop %v1050
    %v1053 = vtanh.pop %v1051
    %s1054 = sadd.s32 %s846, 2
    %p1055 = scmp.lt.s32.totalorder %s1054, 8
    %s1056 = scalar_select %p1055, 1, 0
    %v1057 = vstv %s1056
    %vm1058 = vcmp.eq.s32.totalorder %v1057, 1
    %v1059 = vsel %vm1058, %v1052, %v1004
    %v1060 = vsel %vm1058, %v1053, %v1005
    %v1061 = vld [vmem:[%s557] sm:$0xff]
    %v1062 = vld [vmem:[%s557 + $0x8] sm:$0xff]
    %v1063 = vpack.c.bf16 %v1060, %v1059
    %1064 = vmatprep.subr.bf16.mxu0 0
    %1065 = vmatpush1.bf16.msra.mxu0 %v884
    %1066 = vmatprep.subr.bf16.mxu0 0
    %1067 = vmatpush1.bf16.msra.mxu0 %v885
    %1068 = vmatprep.subr.bf16.mxu0 0
    %1069 = vmatpush1.bf16.msra.mxu0 %v886
    %1070 = vmatprep.subr.bf16.mxu0 0
    %1071 = vmatpush1.bf16.msra.mxu0 %v887
    %1072 = vmatprep.subr.bf16.mxu0 0
    %1073 = vmatpush1.bf16.msra.mxu0 %v888
    %1074 = vmatprep.subr.bf16.mxu0 0
    %1075 = vmatpush1.bf16.msra.mxu0 %v889
    %1076 = vmatprep.subr.bf16.mxu0 0
    %1077 = vmatpush1.bf16.msra.mxu0 %v890
    %1078 = vmatprep.subr.bf16.mxu0 0
    %1079 = vmatpush1.bf16.msra.mxu0 %v891
    %1080 = vmatprep.subr.bf16.mxu0 0
    %1081 = vmatpush1.bf16.msra.mxu0 0
    %1082 = vmatprep.subr.bf16.mxu0 0
    %1083 = vmatpush1.bf16.msra.mxu0 0
    %1084 = vmatprep.subr.bf16.mxu0 0
    %1085 = vmatpush1.bf16.msra.mxu0 0
    %1086 = vmatprep.subr.bf16.mxu0 0
    %1087 = vmatpush1.bf16.msra.mxu0 0
    %1088 = vmatprep.subr.bf16.mxu0 0
    %1089 = vmatpush1.bf16.msra.mxu0 0
    %1090 = vmatprep.subr.bf16.mxu0 0
    %1091 = vmatpush1.bf16.msra.mxu0 0
    %1092 = vmatprep.subr.bf16.mxu0 0
    %1093 = vmatpush1.bf16.msra.mxu0 0
    %1094 = vmatprep.subr.bf16.mxu0 0
    %1095 = vmatpush1.bf16.msra.mxu0 0
    %1096 = vmatprep.mubr.bf16.mxu0 0
    %1097 = vmatmul.mubr.bf16.gmra.mrb[0].mxu0 %v1063
    %v1098 = vpop.f32.mrb[0].mxu0
    %v1099 = vadd.f32 0.0, %v1098
    %v1100 = vpop.f32.mrb[0].mxu0
    %v1101 = vpop.f32.mrb[0].mxu0
    %v1102 = vadd.f32 0.0, %v1101
    %v1103 = vpop.f32.mrb[0].mxu0
    %1104 = vdwg.mxu0
    %v1105 = vadd.f32 %v1061, %v1099
    %v1106 = vadd.f32 %v1062, %v1102
    %v1107 = vtanh.pop %v1105
    %v1108 = vtanh.pop %v1106
    %s1109 = sadd.s32 %s846, 3
    %p1110 = scmp.lt.s32.totalorder %s1109, 8
    %s1111 = scalar_select %p1110, 1, 0
    %v1112 = vstv %s1111
    %vm1113 = vcmp.eq.s32.totalorder %v1112, 1
    %v1114 = vsel %vm1113, %v1107, %v1059
    %v1115 = vsel %vm1113, %v1108, %v1060
    %v1116 = vld [vmem:[%s577] sm:$0xff]
    %v1117 = vld [vmem:[%s577 + $0x8] sm:$0xff]
    %v1118 = vpack.c.bf16 %v1115, %v1114
    %1119 = vmatprep.subr.bf16.mxu0 0
    %1120 = vmatpush1.bf16.msra.mxu0 %v884
    %1121 = vmatprep.subr.bf16.mxu0 0
    %1122 = vmatpush1.bf16.msra.mxu0 %v885
    %1123 = vmatprep.subr.bf16.mxu0 0
    %1124 = vmatpush1.bf16.msra.mxu0 %v886
    %1125 = vmatprep.subr.bf16.mxu0 0
    %1126 = vmatpush1.bf16.msra.mxu0 %v887
    %1127 = vmatprep.subr.bf16.mxu0 0
    %1128 = vmatpush1.bf16.msra.mxu0 %v888
    %1129 = vmatprep.subr.bf16.mxu0 0
    %1130 = vmatpush1.bf16.msra.mxu0 %v889
    %1131 = vmatprep.subr.bf16.mxu0 0
    %1132 = vmatpush1.bf16.msra.mxu0 %v890
    %1133 = vmatprep.subr.bf16.mxu0 0
    %1134 = vmatpush1.bf16.msra.mxu0 %v891
    %1135 = vmatprep.subr.bf16.mxu0 0
    %1136 = vmatpush1.bf16.msra.mxu0 0
    %1137 = vmatprep.subr.bf16.mxu0 0
    %1138 = vmatpush1.bf16.msra.mxu0 0
    %1139 = vmatprep.subr.bf16.mxu0 0
    %1140 = vmatpush1.bf16.msra.mxu0 0
    %1141 = vmatprep.subr.bf16.mxu0 0
    %1142 = vmatpush1.bf16.msra.mxu0 0
    %1143 = vmatprep.subr.bf16.mxu0 0
    %1144 = vmatpush1.bf16.msra.mxu0 0
    %1145 = vmatprep.subr.bf16.mxu0 0
    %1146 = vmatpush1.bf16.msra.mxu0 0
    %1147 = vmatprep.subr.bf16.mxu0 0
    %1148 = vmatpush1.bf16.msra.mxu0 0
    %1149 = vmatprep.subr.bf16.mxu0 0
    %1150 = vmatpush1.bf16.msra.mxu0 0
    %1151 = vmatprep.mubr.bf16.mxu0 0
    %1152 = vmatmul.mubr.bf16.gmra.mrb[0].mxu0 %v1118
    %v1153 = vpop.f32.mrb[0].mxu0
    %v1154 = vadd.f32 0.0, %v1153
    %v1155 = vpop.f32.mrb[0].mxu0
    %v1156 = vpop.f32.mrb[0].mxu0
    %v1157 = vadd.f32 0.0, %v1156
    %v1158 = vpop.f32.mrb[0].mxu0
    %1159 = vdwg.mxu0
    %v1160 = vadd.f32 %v1116, %v1154
    %v1161 = vadd.f32 %v1117, %v1157
    %v1162 = vtanh.pop %v1160
    %v1163 = vtanh.pop %v1161
    %s1164 = sadd.s32 %s846, 4
    %p1165 = scmp.lt.s32.totalorder %s1164, 8
    %s1166 = scalar_select %p1165, 1, 0
    %v1167 = vstv %s1166
    %vm1168 = vcmp.eq.s32.totalorder %v1167, 1
    %v1169 = vsel %vm1168, %v1162, %v1114
    %v1170 = vsel %vm1168, %v1163, %v1115
    %v1171 = vld [vmem:[%s597] sm:$0xff]
    %v1172 = vld [vmem:[%s597 + $0x8] sm:$0xff]
    %v1173 = vpack.c.bf16 %v1170, %v1169
    %1174 = vmatprep.subr.bf16.mxu0 0
    %1175 = vmatpush1.bf16.msra.mxu0 %v884
    %1176 = vmatprep.subr.bf16.mxu0 0
    %1177 = vmatpush1.bf16.msra.mxu0 %v885
    %1178 = vmatprep.subr.bf16.mxu0 0
    %1179 = vmatpush1.bf16.msra.mxu0 %v886
    %1180 = vmatprep.subr.bf16.mxu0 0
    %1181 = vmatpush1.bf16.msra.mxu0 %v887
    %1182 = vmatprep.subr.bf16.mxu0 0
    %1183 = vmatpush1.bf16.msra.mxu0 %v888
    %1184 = vmatprep.subr.bf16.mxu0 0
    %1185 = vmatpush1.bf16.msra.mxu0 %v889
    %1186 = vmatprep.subr.bf16.mxu0 0
    %1187 = vmatpush1.bf16.msra.mxu0 %v890
    %1188 = vmatprep.subr.bf16.mxu0 0
    %1189 = vmatpush1.bf16.msra.mxu0 %v891
    %1190 = vmatprep.subr.bf16.mxu0 0
    %1191 = vmatpush1.bf16.msra.mxu0 0
    %1192 = vmatprep.subr.bf16.mxu0 0
    %1193 = vmatpush1.bf16.msra.mxu0 0
    %1194 = vmatprep.subr.bf16.mxu0 0
    %1195 = vmatpush1.bf16.msra.mxu0 0
    %1196 = vmatprep.subr.bf16.mxu0 0
    %1197 = vmatpush1.bf16.msra.mxu0 0
    %1198 = vmatprep.subr.bf16.mxu0 0
    %1199 = vmatpush1.bf16.msra.mxu0 0
    %1200 = vmatprep.subr.bf16.mxu0 0
    %1201 = vmatpush1.bf16.msra.mxu0 0
    %1202 = vmatprep.subr.bf16.mxu0 0
    %1203 = vmatpush1.bf16.msra.mxu0 0
    %1204 = vmatprep.subr.bf16.mxu0 0
    %1205 = vmatpush1.bf16.msra.mxu0 0
    %1206 = vmatprep.mubr.bf16.mxu0 0
    %1207 = vmatmul.mubr.bf16.gmra.mrb[0].mxu0 %v1173
    %v1208 = vpop.f32.mrb[0].mxu0
    %v1209 = vadd.f32 0.0, %v1208
    %v1210 = vpop.f32.mrb[0].mxu0
    %v1211 = vpop.f32.mrb[0].mxu0
    %v1212 = vadd.f32 0.0, %v1211
    %v1213 = vpop.f32.mrb[0].mxu0
    %1214 = vdwg.mxu0
    %v1215 = vadd.f32 %v1171, %v1209
    %v1216 = vadd.f32 %v1172, %v1212
    %v1217 = vtanh.pop %v1215
    %v1218 = vtanh.pop %v1216
    %s1219 = sadd.s32 %s846, 5
    %p1220 = scmp.lt.s32.totalorder %s1219, 8
    %s1221 = scalar_select %p1220, 1, 0
    %v1222 = vstv %s1221
    %vm1223 = vcmp.eq.s32.totalorder %v1222, 1
    %v1224 = vsel %vm1223, %v1217, %v1169
    %v1225 = vsel %vm1223, %v1218, %v1170
    %v1226 = vld [vmem:[%s617] sm:$0xff]
    %v1227 = vld [vmem:[%s617 + $0x8] sm:$0xff]
    %v1228 = vpack.c.bf16 %v1225, %v1224
    %1229 = vmatprep.subr.bf16.mxu0 0
    %1230 = vmatpush1.bf16.msra.mxu0 %v884
    %1231 = vmatprep.subr.bf16.mxu0 0
    %1232 = vmatpush1.bf16.msra.mxu0 %v885
    %1233 = vmatprep.subr.bf16.mxu0 0
    %1234 = vmatpush1.bf16.msra.mxu0 %v886
    %1235 = vmatprep.subr.bf16.mxu0 0
    %1236 = vmatpush1.bf16.msra.mxu0 %v887
    %1237 = vmatprep.subr.bf16.mxu0 0
    %1238 = vmatpush1.bf16.msra.mxu0 %v888
    %1239 = vmatprep.subr.bf16.mxu0 0
    %1240 = vmatpush1.bf16.msra.mxu0 %v889
    %1241 = vmatprep.subr.bf16.mxu0 0
    %1242 = vmatpush1.bf16.msra.mxu0 %v890
    %1243 = vmatprep.subr.bf16.mxu0 0
    %1244 = vmatpush1.bf16.msra.mxu0 %v891
    %1245 = vmatprep.subr.bf16.mxu0 0
    %1246 = vmatpush1.bf16.msra.mxu0 0
    %1247 = vmatprep.subr.bf16.mxu0 0
    %1248 = vmatpush1.bf16.msra.mxu0 0
    %1249 = vmatprep.subr.bf16.mxu0 0
    %1250 = vmatpush1.bf16.msra.mxu0 0
    %1251 = vmatprep.subr.bf16.mxu0 0
    %1252 = vmatpush1.bf16.msra.mxu0 0
    %1253 = vmatprep.subr.bf16.mxu0 0
    %1254 = vmatpush1.bf16.msra.mxu0 0
    %1255 = vmatprep.subr.bf16.mxu0 0
    %1256 = vmatpush1.bf16.msra.mxu0 0
    %1257 = vmatprep.subr.bf16.mxu0 0
    %1258 = vmatpush1.bf16.msra.mxu0 0
    %1259 = vmatprep.subr.bf16.mxu0 0
    %1260 = vmatpush1.bf16.msra.mxu0 0
    %1261 = vmatprep.mubr.bf16.mxu0 0
    %1262 = vmatmul.mubr.bf16.gmra.mrb[0].mxu0 %v1228
    %v1263 = vpop.f32.mrb[0].mxu0
    %v1264 = vadd.f32 0.0, %v1263
    %v1265 = vpop.f32.mrb[0].mxu0
    %v1266 = vpop.f32.mrb[0].mxu0
    %v1267 = vadd.f32 0.0, %v1266
    %v1268 = vpop.f32.mrb[0].mxu0
    %1269 = vdwg.mxu0
    %v1270 = vadd.f32 %v1226, %v1264
    %v1271 = vadd.f32 %v1227, %v1267
    %v1272 = vtanh.pop %v1270
    %v1273 = vtanh.pop %v1271
    %s1274 = sadd.s32 %s846, 6
    %p1275 = scmp.lt.s32.totalorder %s1274, 8
    %s1276 = scalar_select %p1275, 1, 0
    %v1277 = vstv %s1276
    %vm1278 = vcmp.eq.s32.totalorder %v1277, 1
    %v1279 = vsel %vm1278, %v1272, %v1224
    %v1280 = vsel %vm1278, %v1273, %v1225
    %v1281 = vld [vmem:[%s637] sm:$0xff]
    %v1282 = vld [vmem:[%s637 + $0x8] sm:$0xff]
    %v1283 = vpack.c.bf16 %v1280, %v1279
    %1284 = vmatprep.subr.bf16.mxu0 0
    %1285 = vmatpush1.bf16.msra.mxu0 %v884
    %1286 = vmatprep.subr.bf16.mxu0 0
    %1287 = vmatpush1.bf16.msra.mxu0 %v885
    %1288 = vmatprep.subr.bf16.mxu0 0
    %1289 = vmatpush1.bf16.msra.mxu0 %v886
    %1290 = vmatprep.subr.bf16.mxu0 0
    %1291 = vmatpush1.bf16.msra.mxu0 %v887
    %1292 = vmatprep.subr.bf16.mxu0 0
    %1293 = vmatpush1.bf16.msra.mxu0 %v888
    %1294 = vmatprep.subr.bf16.mxu0 0
    %1295 = vmatpush1.bf16.msra.mxu0 %v889
    %1296 = vmatprep.subr.bf16.mxu0 0
    %1297 = vmatpush1.bf16.msra.mxu0 %v890
    %1298 = vmatprep.subr.bf16.mxu0 0
    %1299 = vmatpush1.bf16.msra.mxu0 %v891
    %1300 = vmatprep.subr.bf16.mxu0 0
    %1301 = vmatpush1.bf16.msra.mxu0 0
    %1302 = vmatprep.subr.bf16.mxu0 0
    %1303 = vmatpush1.bf16.msra.mxu0 0
    %1304 = vmatprep.subr.bf16.mxu0 0
    %1305 = vmatpush1.bf16.msra.mxu0 0
    %1306 = vmatprep.subr.bf16.mxu0 0
    %1307 = vmatpush1.bf16.msra.mxu0 0
    %1308 = vmatprep.subr.bf16.mxu0 0
    %1309 = vmatpush1.bf16.msra.mxu0 0
    %1310 = vmatprep.subr.bf16.mxu0 0
    %1311 = vmatpush1.bf16.msra.mxu0 0
    %1312 = vmatprep.subr.bf16.mxu0 0
    %1313 = vmatpush1.bf16.msra.mxu0 0
    %1314 = vmatprep.subr.bf16.mxu0 0
    %1315 = vmatpush1.bf16.msra.mxu0 0
    %1316 = vmatprep.mubr.bf16.mxu0 0
    %1317 = vmatmul.mubr.bf16.gmra.mrb[0].mxu0 %v1283
    %v1318 = vpop.f32.mrb[0].mxu0
    %v1319 = vadd.f32 0.0, %v1318
    %v1320 = vpop.f32.mrb[0].mxu0
    %v1321 = vpop.f32.mrb[0].mxu0
    %v1322 = vadd.f32 0.0, %v1321
    %v1323 = vpop.f32.mrb[0].mxu0
    %1324 = vdwg.mxu0
    %v1325 = vadd.f32 %v1281, %v1319
    %v1326 = vadd.f32 %v1282, %v1322
    %v1327 = vtanh.pop %v1325
    %v1328 = vtanh.pop %v1326
    %s1329 = sadd.s32 %s846, 7
    %p1330 = scmp.lt.s32.totalorder %s1329, 8
    %s1331 = scalar_select %p1330, 1, 0
    %v1332 = vstv %s1331
    %vm1333 = vcmp.eq.s32.totalorder %v1332, 1
    %v1334 = vsel %vm1333, %v1327, %v1279
    %v1335 = vsel %vm1333, %v1328, %v1280
    %v1336 = vld [vmem:[%s687] sm:$0xff]
    %v1337 = vld [vmem:[%s687 + $0x8] sm:$0xff]
    %v1338 = vpack.c.bf16 %v1335, %v1334
    %1339 = vmatprep.subr.bf16.mxu0 0
    %1340 = vmatpush1.bf16.msra.mxu0 %v884
    %1341 = vmatprep.subr.bf16.mxu0 0
    %1342 = vmatpush1.bf16.msra.mxu0 %v885
    %1343 = vmatprep.subr.bf16.mxu0 0
    %1344 = vmatpush1.bf16.msra.mxu0 %v886
    %1345 = vmatprep.subr.bf16.mxu0 0
    %1346 = vmatpush1.bf16.msra.mxu0 %v887
    %1347 = vmatprep.subr.bf16.mxu0 0
    %1348 = vmatpush1.bf16.msra.mxu0 %v888
    %1349 = vmatprep.subr.bf16.mxu0 0
    %1350 = vmatpush1.bf16.msra.mxu0 %v889
    %1351 = vmatprep.subr.bf16.mxu0 0
    %1352 = vmatpush1.bf16.msra.mxu0 %v890
    %1353 = vmatprep.subr.bf16.mxu0 0
    %1354 = vmatpush1.bf16.msra.mxu0 %v891
    %1355 = vmatprep.subr.bf16.mxu0 0
    %1356 = vmatpush1.bf16.msra.mxu0 0
    %1357 = vmatprep.subr.bf16.mxu0 0
    %1358 = vmatpush1.bf16.msra.mxu0 0
    %1359 = vmatprep.subr.bf16.mxu0 0
    %1360 = vmatpush1.bf16.msra.mxu0 0
    %1361 = vmatprep.subr.bf16.mxu0 0
    %1362 = vmatpush1.bf16.msra.mxu0 0
    %1363 = vmatprep.subr.bf16.mxu0 0
    %1364 = vmatpush1.bf16.msra.mxu0 0
    %1365 = vmatprep.subr.bf16.mxu0 0
    %1366 = vmatpush1.bf16.msra.mxu0 0
    %1367 = vmatprep.subr.bf16.mxu0 0
    %1368 = vmatpush1.bf16.msra.mxu0 0
    %1369 = vmatprep.subr.bf16.mxu0 0
    %1370 = vmatpush1.bf16.msra.mxu0 0
    %1371 = vmatprep.mubr.bf16.mxu0 0
    %1372 = vmatmul.mubr.bf16.gmra.mrb[0].mxu0 %v1338
    %v1373 = vpop.f32.mrb[0].mxu0
    %v1374 = vadd.f32 0.0, %v1373
    %v1375 = vpop.f32.mrb[0].mxu0
    %v1376 = vpop.f32.mrb[0].mxu0
    %v1377 = vadd.f32 0.0, %v1376
    %v1378 = vpop.f32.mrb[0].mxu0
    %1379 = vdwg.mxu0
    %v1380 = vadd.f32 %v1336, %v1374
    %v1381 = vadd.f32 %v1337, %v1377
    %v1382 = vtanh.pop %v1380
    %v1383 = vtanh.pop %v1381
    %s1384 = sadd.s32 %s846, 8
    %p1385 = scmp.lt.s32.totalorder %s1384, 8
    %s1386 = scalar_select %p1385, 1, 0
    %v1387 = vstv %s1386
    %vm1388 = vcmp.eq.s32.totalorder %v1387, 1
    %v1389 = vsel %vm1388, %v1382, %v1334
    %v1390 = vsel %vm1388, %v1383, %v1335
    %v1391 = vld [vmem:[%s706] sm:$0xff]
    %v1392 = vld [vmem:[%s706 + $0x8] sm:$0xff]
    %v1393 = vpack.c.bf16 %v1390, %v1389
    %1394 = vmatprep.subr.bf16.mxu0 0
    %1395 = vmatpush1.bf16.msra.mxu0 %v884
    %1396 = vmatprep.subr.bf16.mxu0 0
    %1397 = vmatpush1.bf16.msra.mxu0 %v885
    %1398 = vmatprep.subr.bf16.mxu0 0
    %1399 = vmatpush1.bf16.msra.mxu0 %v886
    %1400 = vmatprep.subr.bf16.mxu0 0
    %1401 = vmatpush1.bf16.msra.mxu0 %v887
    %1402 = vmatprep.subr.bf16.mxu0 0
    %1403 = vmatpush1.bf16.msra.mxu0 %v888
    %1404 = vmatprep.subr.bf16.mxu0 0
    %1405 = vmatpush1.bf16.msra.mxu0 %v889
    %1406 = vmatprep.subr.bf16.mxu0 0
    %1407 = vmatpush1.bf16.msra.mxu0 %v890
    %1408 = vmatprep.subr.bf16.mxu0 0
    %1409 = vmatpush1.bf16.msra.mxu0 %v891
    %1410 = vmatprep.subr.bf16.mxu0 0
    %1411 = vmatpush1.bf16.msra.mxu0 0
    %1412 = vmatprep.subr.bf16.mxu0 0
    %1413 = vmatpush1.bf16.msra.mxu0 0
    %1414 = vmatprep.subr.bf16.mxu0 0
    %1415 = vmatpush1.bf16.msra.mxu0 0
    %1416 = vmatprep.subr.bf16.mxu0 0
    %1417 = vmatpush1.bf16.msra.mxu0 0
    %1418 = vmatprep.subr.bf16.mxu0 0
    %1419 = vmatpush1.bf16.msra.mxu0 0
    %1420 = vmatprep.subr.bf16.mxu0 0
    %1421 = vmatpush1.bf16.msra.mxu0 0
    %1422 = vmatprep.subr.bf16.mxu0 0
    %1423 = vmatpush1.bf16.msra.mxu0 0
    %1424 = vmatprep.subr.bf16.mxu0 0
    %1425 = vmatpush1.bf16.msra.mxu0 0
    %1426 = vmatprep.mubr.bf16.mxu0 0
    %1427 = vmatmul.mubr.bf16.gmra.mrb[0].mxu0 %v1393
    %v1428 = vpop.f32.mrb[0].mxu0
    %v1429 = vadd.f32 0.0, %v1428
    %v1430 = vpop.f32.mrb[0].mxu0
    %v1431 = vpop.f32.mrb[0].mxu0
    %v1432 = vadd.f32 0.0, %v1431
    %v1433 = vpop.f32.mrb[0].mxu0
    %1434 = vdwg.mxu0
    %v1435 = vadd.f32 %v1391, %v1429
    %v1436 = vadd.f32 %v1392, %v1432
    %v1437 = vtanh.pop %v1435
    %v1438 = vtanh.pop %v1436
    %s1439 = sadd.s32 %s846, 9
    %p1440 = scmp.lt.s32.totalorder %s1439, 8
    %s1441 = scalar_select %p1440, 1, 0
    %v1442 = vstv %s1441
    %vm1443 = vcmp.eq.s32.totalorder %v1442, 1
    %v1444 = vsel %vm1443, %v1437, %v1389
    %v1445 = vsel %vm1443, %v1438, %v1390
    %v1446 = vld [vmem:[%s726] sm:$0xff]
    %v1447 = vld [vmem:[%s726 + $0x8] sm:$0xff]
    %v1448 = vpack.c.bf16 %v1445, %v1444
    %1449 = vmatprep.subr.bf16.mxu0 0
    %1450 = vmatpush1.bf16.msra.mxu0 %v884
    %1451 = vmatprep.subr.bf16.mxu0 0
    %1452 = vmatpush1.bf16.msra.mxu0 %v885
    %1453 = vmatprep.subr.bf16.mxu0 0
    %1454 = vmatpush1.bf16.msra.mxu0 %v886
    %1455 = vmatprep.subr.bf16.mxu0 0
    %1456 = vmatpush1.bf16.msra.mxu0 %v887
    %1457 = vmatprep.subr.bf16.mxu0 0
    %1458 = vmatpush1.bf16.msra.mxu0 %v888
    %1459 = vmatprep.subr.bf16.mxu0 0
    %1460 = vmatpush1.bf16.msra.mxu0 %v889
    %1461 = vmatprep.subr.bf16.mxu0 0
    %1462 = vmatpush1.bf16.msra.mxu0 %v890
    %1463 = vmatprep.subr.bf16.mxu0 0
    %1464 = vmatpush1.bf16.msra.mxu0 %v891
    %1465 = vmatprep.subr.bf16.mxu0 0
    %1466 = vmatpush1.bf16.msra.mxu0 0
    %1467 = vmatprep.subr.bf16.mxu0 0
    %1468 = vmatpush1.bf16.msra.mxu0 0
    %1469 = vmatprep.subr.bf16.mxu0 0
    %1470 = vmatpush1.bf16.msra.mxu0 0
    %1471 = vmatprep.subr.bf16.mxu0 0
    %1472 = vmatpush1.bf16.msra.mxu0 0
    %1473 = vmatprep.subr.bf16.mxu0 0
    %1474 = vmatpush1.bf16.msra.mxu0 0
    %1475 = vmatprep.subr.bf16.mxu0 0
    %1476 = vmatpush1.bf16.msra.mxu0 0
    %1477 = vmatprep.subr.bf16.mxu0 0
    %1478 = vmatpush1.bf16.msra.mxu0 0
    %1479 = vmatprep.subr.bf16.mxu0 0
    %1480 = vmatpush1.bf16.msra.mxu0 0
    %1481 = vmatprep.mubr.bf16.mxu0 0
    %1482 = vmatmul.mubr.bf16.gmra.mrb[0].mxu0 %v1448
    %v1483 = vpop.f32.mrb[0].mxu0
    %v1484 = vadd.f32 0.0, %v1483
    %v1485 = vpop.f32.mrb[0].mxu0
    %v1486 = vpop.f32.mrb[0].mxu0
    %v1487 = vadd.f32 0.0, %v1486
    %v1488 = vpop.f32.mrb[0].mxu0
    %1489 = vdwg.mxu0
    %v1490 = vadd.f32 %v1446, %v1484
    %v1491 = vadd.f32 %v1447, %v1487
    %v1492 = vtanh.pop %v1490
    %v1493 = vtanh.pop %v1491
    %s1494 = sadd.s32 %s846, 10
    %p1495 = scmp.lt.s32.totalorder %s1494, 8
    %s1496 = scalar_select %p1495, 1, 0
    %v1497 = vstv %s1496
    %vm1498 = vcmp.eq.s32.totalorder %v1497, 1
    %v1499 = vsel %vm1498, %v1492, %v1444
    %v1500 = vsel %vm1498, %v1493, %v1445
    %v1501 = vld [vmem:[%s746] sm:$0xff]
    %v1502 = vld [vmem:[%s746 + $0x8] sm:$0xff]
    %v1503 = vpack.c.bf16 %v1500, %v1499
    %1504 = vmatprep.subr.bf16.mxu0 0
    %1505 = vmatpush1.bf16.msra.mxu0 %v884
    %1506 = vmatprep.subr.bf16.mxu0 0
    %1507 = vmatpush1.bf16.msra.mxu0 %v885
    %1508 = vmatprep.subr.bf16.mxu0 0
    %1509 = vmatpush1.bf16.msra.mxu0 %v886
    %1510 = vmatprep.subr.bf16.mxu0 0
    %1511 = vmatpush1.bf16.msra.mxu0 %v887
    %1512 = vmatprep.subr.bf16.mxu0 0
    %1513 = vmatpush1.bf16.msra.mxu0 %v888
    %1514 = vmatprep.subr.bf16.mxu0 0
    %1515 = vmatpush1.bf16.msra.mxu0 %v889
    %1516 = vmatprep.subr.bf16.mxu0 0
    %1517 = vmatpush1.bf16.msra.mxu0 %v890
    %1518 = vmatprep.subr.bf16.mxu0 0
    %1519 = vmatpush1.bf16.msra.mxu0 %v891
    %1520 = vmatprep.subr.bf16.mxu0 0
    %1521 = vmatpush1.bf16.msra.mxu0 0
    %1522 = vmatprep.subr.bf16.mxu0 0
    %1523 = vmatpush1.bf16.msra.mxu0 0
    %1524 = vmatprep.subr.bf16.mxu0 0
    %1525 = vmatpush1.bf16.msra.mxu0 0
    %1526 = vmatprep.subr.bf16.mxu0 0
    %1527 = vmatpush1.bf16.msra.mxu0 0
    %1528 = vmatprep.subr.bf16.mxu0 0
    %1529 = vmatpush1.bf16.msra.mxu0 0
    %1530 = vmatprep.subr.bf16.mxu0 0
    %1531 = vmatpush1.bf16.msra.mxu0 0
    %1532 = vmatprep.subr.bf16.mxu0 0
    %1533 = vmatpush1.bf16.msra.mxu0 0
    %1534 = vmatprep.subr.bf16.mxu0 0
    %1535 = vmatpush1.bf16.msra.mxu0 0
    %1536 = vmatprep.mubr.bf16.mxu0 0
    %1537 = vmatmul.mubr.bf16.gmra.mrb[0].mxu0 %v1503
    %v1538 = vpop.f32.mrb[0].mxu0
    %v1539 = vadd.f32 0.0, %v1538
    %v1540 = vpop.f32.mrb[0].mxu0
    %v1541 = vpop.f32.mrb[0].mxu0
    %v1542 = vadd.f32 0.0, %v1541
    %v1543 = vpop.f32.mrb[0].mxu0
    %1544 = vdwg.mxu0
    %v1545 = vadd.f32 %v1501, %v1539
    %v1546 = vadd.f32 %v1502, %v1542
    %v1547 = vtanh.pop %v1545
    %v1548 = vtanh.pop %v1546
    %s1549 = sadd.s32 %s846, 11
    %p1550 = scmp.lt.s32.totalorder %s1549, 8
    %s1551 = scalar_select %p1550, 1, 0
    %v1552 = vstv %s1551
    %vm1553 = vcmp.eq.s32.totalorder %v1552, 1
    %v1554 = vsel %vm1553, %v1547, %v1499
    %v1555 = vsel %vm1553, %v1548, %v1500
    %v1556 = vld [vmem:[%s766] sm:$0xff]
    %v1557 = vld [vmem:[%s766 + $0x8] sm:$0xff]
    %v1558 = vpack.c.bf16 %v1555, %v1554
    %1559 = vmatprep.subr.bf16.mxu0 0
    %1560 = vmatpush1.bf16.msra.mxu0 %v884
    %1561 = vmatprep.subr.bf16.mxu0 0
    %1562 = vmatpush1.bf16.msra.mxu0 %v885
    %1563 = vmatprep.subr.bf16.mxu0 0
    %1564 = vmatpush1.bf16.msra.mxu0 %v886
    %1565 = vmatprep.subr.bf16.mxu0 0
    %1566 = vmatpush1.bf16.msra.mxu0 %v887
    %1567 = vmatprep.subr.bf16.mxu0 0
    %1568 = vmatpush1.bf16.msra.mxu0 %v888
    %1569 = vmatprep.subr.bf16.mxu0 0
    %1570 = vmatpush1.bf16.msra.mxu0 %v889
    %1571 = vmatprep.subr.bf16.mxu0 0
    %1572 = vmatpush1.bf16.msra.mxu0 %v890
    %1573 = vmatprep.subr.bf16.mxu0 0
    %1574 = vmatpush1.bf16.msra.mxu0 %v891
    %1575 = vmatprep.subr.bf16.mxu0 0
    %1576 = vmatpush1.bf16.msra.mxu0 0
    %1577 = vmatprep.subr.bf16.mxu0 0
    %1578 = vmatpush1.bf16.msra.mxu0 0
    %1579 = vmatprep.subr.bf16.mxu0 0
    %1580 = vmatpush1.bf16.msra.mxu0 0
    %1581 = vmatprep.subr.bf16.mxu0 0
    %1582 = vmatpush1.bf16.msra.mxu0 0
    %1583 = vmatprep.subr.bf16.mxu0 0
    %1584 = vmatpush1.bf16.msra.mxu0 0
    %1585 = vmatprep.subr.bf16.mxu0 0
    %1586 = vmatpush1.bf16.msra.mxu0 0
    %1587 = vmatprep.subr.bf16.mxu0 0
    %1588 = vmatpush1.bf16.msra.mxu0 0
    %1589 = vmatprep.subr.bf16.mxu0 0
    %1590 = vmatpush1.bf16.msra.mxu0 0
    %1591 = vmatprep.mubr.bf16.mxu0 0
    %1592 = vmatmul.mubr.bf16.gmra.mrb[0].mxu0 %v1558
    %v1593 = vpop.f32.mrb[0].mxu0
    %v1594 = vadd.f32 0.0, %v1593
    %v1595 = vpop.f32.mrb[0].mxu0
    %v1596 = vpop.f32.mrb[0].mxu0
    %v1597 = vadd.f32 0.0, %v1596
    %v1598 = vpop.f32.mrb[0].mxu0
    %1599 = vdwg.mxu0
    %v1600 = vadd.f32 %v1556, %v1594
    %v1601 = vadd.f32 %v1557, %v1597
    %v1602 = vtanh.pop %v1600
    %v1603 = vtanh.pop %v1601
    %s1604 = sadd.s32 %s846, 12
    %p1605 = scmp.lt.s32.totalorder %s1604, 8
    %s1606 = scalar_select %p1605, 1, 0
    %v1607 = vstv %s1606
    %vm1608 = vcmp.eq.s32.totalorder %v1607, 1
    %v1609 = vsel %vm1608, %v1602, %v1554
    %v1610 = vsel %vm1608, %v1603, %v1555
    %v1611 = vld [vmem:[%s786] sm:$0xff]
    %v1612 = vld [vmem:[%s786 + $0x8] sm:$0xff]
    %v1613 = vpack.c.bf16 %v1610, %v1609
    %1614 = vmatprep.subr.bf16.mxu0 0
    %1615 = vmatpush1.bf16.msra.mxu0 %v884
    %1616 = vmatprep.subr.bf16.mxu0 0
    %1617 = vmatpush1.bf16.msra.mxu0 %v885
    %1618 = vmatprep.subr.bf16.mxu0 0
    %1619 = vmatpush1.bf16.msra.mxu0 %v886
    %1620 = vmatprep.subr.bf16.mxu0 0
    %1621 = vmatpush1.bf16.msra.mxu0 %v887
    %1622 = vmatprep.subr.bf16.mxu0 0
    %1623 = vmatpush1.bf16.msra.mxu0 %v888
    %1624 = vmatprep.subr.bf16.mxu0 0
    %1625 = vmatpush1.bf16.msra.mxu0 %v889
    %1626 = vmatprep.subr.bf16.mxu0 0
    %1627 = vmatpush1.bf16.msra.mxu0 %v890
    %1628 = vmatprep.subr.bf16.mxu0 0
    %1629 = vmatpush1.bf16.msra.mxu0 %v891
    %1630 = vmatprep.subr.bf16.mxu0 0
    %1631 = vmatpush1.bf16.msra.mxu0 0
    %1632 = vmatprep.subr.bf16.mxu0 0
    %1633 = vmatpush1.bf16.msra.mxu0 0
    %1634 = vmatprep.subr.bf16.mxu0 0
    %1635 = vmatpush1.bf16.msra.mxu0 0
    %1636 = vmatprep.subr.bf16.mxu0 0
    %1637 = vmatpush1.bf16.msra.mxu0 0
    %1638 = vmatprep.subr.bf16.mxu0 0
    %1639 = vmatpush1.bf16.msra.mxu0 0
    %1640 = vmatprep.subr.bf16.mxu0 0
    %1641 = vmatpush1.bf16.msra.mxu0 0
    %1642 = vmatprep.subr.bf16.mxu0 0
    %1643 = vmatpush1.bf16.msra.mxu0 0
    %1644 = vmatprep.subr.bf16.mxu0 0
    %1645 = vmatpush1.bf16.msra.mxu0 0
    %1646 = vmatprep.mubr.bf16.mxu0 0
    %1647 = vmatmul.mubr.bf16.gmra.mrb[0].mxu0 %v1613
    %v1648 = vpop.f32.mrb[0].mxu0
    %v1649 = vadd.f32 0.0, %v1648
    %v1650 = vpop.f32.mrb[0].mxu0
    %v1651 = vpop.f32.mrb[0].mxu0
    %v1652 = vadd.f32 0.0, %v1651
    %v1653 = vpop.f32.mrb[0].mxu0
    %1654 = vdwg.mxu0
    %v1655 = vadd.f32 %v1611, %v1649
    %v1656 = vadd.f32 %v1612, %v1652
    %v1657 = vtanh.pop %v1655
    %v1658 = vtanh.pop %v1656
    %s1659 = sadd.s32 %s846, 13
    %p1660 = scmp.lt.s32.totalorder %s1659, 8
    %s1661 = scalar_select %p1660, 1, 0
    %v1662 = vstv %s1661
    %vm1663 = vcmp.eq.s32.totalorder %v1662, 1
    %v1664 = vsel %vm1663, %v1657, %v1609
    %v1665 = vsel %vm1663, %v1658, %v1610
    %v1666 = vld [vmem:[%s806] sm:$0xff]
    %v1667 = vld [vmem:[%s806 + $0x8] sm:$0xff]
    %v1668 = vpack.c.bf16 %v1665, %v1664
    %1669 = vmatprep.subr.bf16.mxu0 0
    %1670 = vmatpush1.bf16.msra.mxu0 %v884
    %1671 = vmatprep.subr.bf16.mxu0 0
    %1672 = vmatpush1.bf16.msra.mxu0 %v885
    %1673 = vmatprep.subr.bf16.mxu0 0
    %1674 = vmatpush1.bf16.msra.mxu0 %v886
    %1675 = vmatprep.subr.bf16.mxu0 0
    %1676 = vmatpush1.bf16.msra.mxu0 %v887
    %1677 = vmatprep.subr.bf16.mxu0 0
    %1678 = vmatpush1.bf16.msra.mxu0 %v888
    %1679 = vmatprep.subr.bf16.mxu0 0
    %1680 = vmatpush1.bf16.msra.mxu0 %v889
    %1681 = vmatprep.subr.bf16.mxu0 0
    %1682 = vmatpush1.bf16.msra.mxu0 %v890
    %1683 = vmatprep.subr.bf16.mxu0 0
    %1684 = vmatpush1.bf16.msra.mxu0 %v891
    %1685 = vmatprep.subr.bf16.mxu0 0
    %1686 = vmatpush1.bf16.msra.mxu0 0
    %1687 = vmatprep.subr.bf16.mxu0 0
    %1688 = vmatpush1.bf16.msra.mxu0 0
    %1689 = vmatprep.subr.bf16.mxu0 0
    %1690 = vmatpush1.bf16.msra.mxu0 0
    %1691 = vmatprep.subr.bf16.mxu0 0
    %1692 = vmatpush1.bf16.msra.mxu0 0
    %1693 = vmatprep.subr.bf16.mxu0 0
    %1694 = vmatpush1.bf16.msra.mxu0 0
    %1695 = vmatprep.subr.bf16.mxu0 0
    %1696 = vmatpush1.bf16.msra.mxu0 0
    %1697 = vmatprep.subr.bf16.mxu0 0
    %1698 = vmatpush1.bf16.msra.mxu0 0
    %1699 = vmatprep.subr.bf16.mxu0 0
    %1700 = vmatpush1.bf16.msra.mxu0 0
    %1701 = vmatprep.mubr.bf16.mxu0 0
    %1702 = vmatmul.mubr.bf16.gmra.mrb[0].mxu0 %v1668
    %v1703 = vpop.f32.mrb[0].mxu0
    %v1704 = vadd.f32 0.0, %v1703
    %v1705 = vpop.f32.mrb[0].mxu0
    %v1706 = vpop.f32.mrb[0].mxu0
    %v1707 = vadd.f32 0.0, %v1706
    %v1708 = vpop.f32.mrb[0].mxu0
    %1709 = vdwg.mxu0
    %v1710 = vadd.f32 %v1666, %v1704
    %v1711 = vadd.f32 %v1667, %v1707
    %v1712 = vtanh.pop %v1710
    %v1713 = vtanh.pop %v1711
    %s1714 = sadd.s32 %s846, 14
    %p1715 = scmp.lt.s32.totalorder %s1714, 8
    %s1716 = scalar_select %p1715, 1, 0
    %v1717 = vstv %s1716
    %vm1718 = vcmp.eq.s32.totalorder %v1717, 1
    %v1719 = vsel %vm1718, %v1712, %v1664
    %v1720 = vsel %vm1718, %v1713, %v1665
    %v1721 = vld [vmem:[%s826] sm:$0xff]
    %v1722 = vld [vmem:[%s826 + $0x8] sm:$0xff]
    %v1723 = vpack.c.bf16 %v1720, %v1719
    %1724 = vmatprep.subr.bf16.mxu0 0
    %1725 = vmatpush1.bf16.msra.mxu0 %v884
    %1726 = vmatprep.subr.bf16.mxu0 0
    %1727 = vmatpush1.bf16.msra.mxu0 %v885
    %1728 = vmatprep.subr.bf16.mxu0 0
    %1729 = vmatpush1.bf16.msra.mxu0 %v886
    %1730 = vmatprep.subr.bf16.mxu0 0
    %1731 = vmatpush1.bf16.msra.mxu0 %v887
    %1732 = vmatprep.subr.bf16.mxu0 0
    %1733 = vmatpush1.bf16.msra.mxu0 %v888
    %1734 = vmatprep.subr.bf16.mxu0 0
    %1735 = vmatpush1.bf16.msra.mxu0 %v889
    %1736 = vmatprep.subr.bf16.mxu0 0
    %1737 = vmatpush1.bf16.msra.mxu0 %v890
    %1738 = vmatprep.subr.bf16.mxu0 0
    %1739 = vmatpush1.bf16.msra.mxu0 %v891
    %1740 = vmatprep.subr.bf16.mxu0 0
    %1741 = vmatpush1.bf16.msra.mxu0 0
    %1742 = vmatprep.subr.bf16.mxu0 0
    %1743 = vmatpush1.bf16.msra.mxu0 0
    %1744 = vmatprep.subr.bf16.mxu0 0
    %1745 = vmatpush1.bf16.msra.mxu0 0
    %1746 = vmatprep.subr.bf16.mxu0 0
    %1747 = vmatpush1.bf16.msra.mxu0 0
    %1748 = vmatprep.subr.bf16.mxu0 0
    %1749 = vmatpush1.bf16.msra.mxu0 0
    %1750 = vmatprep.subr.bf16.mxu0 0
    %1751 = vmatpush1.bf16.msra.mxu0 0
    %1752 = vmatprep.subr.bf16.mxu0 0
    %1753 = vmatpush1.bf16.msra.mxu0 0
    %1754 = vmatprep.subr.bf16.mxu0 0
    %1755 = vmatpush1.bf16.msra.mxu0 0
    %1756 = vmatprep.mubr.bf16.mxu0 0
    %1757 = vmatmul.mubr.bf16.gmra.mrb[0].mxu0 %v1723
    %v1758 = vpop.f32.mrb[0].mxu0
    %v1759 = vadd.f32 0.0, %v1758
    %v1760 = vpop.f32.mrb[0].mxu0
    %v1761 = vpop.f32.mrb[0].mxu0
    %v1762 = vadd.f32 0.0, %v1761
    %v1763 = vpop.f32.mrb[0].mxu0
    %1764 = vdwg.mxu0
    %v1765 = vadd.f32 %v1721, %v1759
    %v1766 = vadd.f32 %v1722, %v1762
    %v1767 = vtanh.pop %v1765
    %v1768 = vtanh.pop %v1766
    %s1769 = sadd.s32 %s846, 15
    %p1770 = scmp.lt.s32.totalorder %s1769, 8
    %s1771 = scalar_select %p1770, 1, 0
    %v1772 = vstv %s1771
    %vm1773 = vcmp.eq.s32.totalorder %v1772, 1
    %v1774 = vsel %vm1773, %v1767, %v1719
    %v1775 = vsel %vm1773, %v1768, %v1720
    %1776 = vst [vmem:[#allocation2] sm:$0xff] %v1774
    %1777 = vst [vmem:[#allocation2 + $0x8] sm:$0xff] %v1775
    // Predicated region
    $region46: #{tpu_custom_call.1} parent=1 // pred_check
      %p1778 = pneg %p80
    $region47: #{tpu_custom_call.1} parent=1 // pred_check_branch
      %1780 = sbr.rel (%p1778) target = $region49
    $region48: #{tpu_custom_call.1} parent=1 // pred_region
      %v1781 = vpack.c.bf16 %v1775, %v1774
      %v1782 = vld [vmem:[#allocation10] sm:$0xf]
      %v1783 = vld [vmem:[#allocation10 + $0x4] sm:$0xf]
      %v1784 = vld [vmem:[#allocation10 + $0x8] sm:$0xf]
      %v1785 = vld [vmem:[#allocation10 + $0xc] sm:$0xf]
      %v1786 = vld [vmem:[#allocation10 + $0x10] sm:$0xf]
      %v1787 = vld [vmem:[#allocation10 + $0x14] sm:$0xf]
      %v1788 = vld [vmem:[#allocation10 + $0x18] sm:$0xf]
      %v1789 = vld [vmem:[#allocation10 + $0x1c] sm:$0xf]
      %v1790 = vld [vmem:[#allocation10 + $0x20] sm:$0xf]
      %v1791 = vld [vmem:[#allocation10 + $0x24] sm:$0xf]
      %v1792 = vld [vmem:[#allocation10 + $0x28] sm:$0xf]
      %v1793 = vld [vmem:[#allocation10 + $0x2c] sm:$0xf]
      %v1794 = vld [vmem:[#allocation10 + $0x30] sm:$0xf]
      %v1795 = vld [vmem:[#allocation10 + $0x34] sm:$0xf]
      %v1796 = vld [vmem:[#allocation10 + $0x38] sm:$0xf]
      %v1797 = vld [vmem:[#allocation10 + $0x3c] sm:$0xf]
      %v1798 = vld [vmem:[%s5] sm:$0x1]
      %v1800 = vlaneseq
      %v1801 = vshrl.u32 %v1800, 7
      %v1802 = vsub.s32 0, %v1801
      %v1803 = vrot.slane %v1798, %v1802
      %v1821 = vunpack.c.l.b16 %v1782
      %v1822 = vunpack.c.l.b16 %v1783
      %v1823 = vunpack.c.l.b16 %v1784
      %v1824 = vunpack.c.l.b16 %v1785
      %v1825 = vunpack.c.l.b16 %v1786
      %v1826 = vunpack.c.l.b16 %v1787
      %v1827 = vunpack.c.l.b16 %v1788
      %v1828 = vunpack.c.l.b16 %v1789
      %v1829 = vunpack.c.l.b16 %v1790
      %v1830 = vunpack.c.l.b16 %v1791
      %v1831 = vunpack.c.l.b16 %v1792
      %v1832 = vunpack.c.l.b16 %v1793
      %v1833 = vunpack.c.l.b16 %v1794
      %v1834 = vunpack.c.l.b16 %v1795
      %v1835 = vunpack.c.l.b16 %v1796
      %v1836 = vunpack.c.l.b16 %v1797
      %v1837 = vpack.c.b16 %v1822, %v1821
      %v1838 = vpack.c.b16 %v1824, %v1823
      %v1839 = vpack.c.b16 %v1826, %v1825
      %v1840 = vpack.c.b16 %v1828, %v1827
      %v1841 = vpack.c.b16 %v1830, %v1829
      %v1842 = vpack.c.b16 %v1832, %v1831
      %v1843 = vpack.c.b16 %v1834, %v1833
      %v1844 = vpack.c.b16 %v1836, %v1835
      %1853 = vmatprep.subr.bf16.mxu0 0
      %1854 = vmatpush1.bf16.msra.mxu0 %v1837
      %1855 = vmatprep.subr.bf16.mxu0 0
      %1856 = vmatpush1.bf16.msra.mxu0 %v1838
      %1857 = vmatprep.subr.bf16.mxu0 0
      %1858 = vmatpush1.bf16.msra.mxu0 %v1839
      %1859 = vmatprep.subr.bf16.mxu0 0
      %1860 = vmatpush1.bf16.msra.mxu0 %v1840
      %1861 = vmatprep.subr.bf16.mxu0 0
      %1862 = vmatpush1.bf16.msra.mxu0 %v1841
      %1863 = vmatprep.subr.bf16.mxu0 0
      %1864 = vmatpush1.bf16.msra.mxu0 %v1842
      %1865 = vmatprep.subr.bf16.mxu0 0
      %1866 = vmatpush1.bf16.msra.mxu0 %v1843
      %1867 = vmatprep.subr.bf16.mxu0 0
      %1868 = vmatpush1.bf16.msra.mxu0 %v1844
      %1869 = vmatprep.subr.bf16.mxu0 0
      %1870 = vmatpush1.bf16.msra.mxu0 0
      %1871 = vmatprep.subr.bf16.mxu0 0
      %1872 = vmatpush1.bf16.msra.mxu0 0
      %1873 = vmatprep.subr.bf16.mxu0 0
      %1874 = vmatpush1.bf16.msra.mxu0 0
      %1875 = vmatprep.subr.bf16.mxu0 0
      %1876 = vmatpush1.bf16.msra.mxu0 0
      %1877 = vmatprep.subr.bf16.mxu0 0
      %1878 = vmatpush1.bf16.msra.mxu0 0
      %1879 = vmatprep.subr.bf16.mxu0 0
      %1880 = vmatpush1.bf16.msra.mxu0 0
      %1881 = vmatprep.subr.bf16.mxu0 0
      %1882 = vmatpush1.bf16.msra.mxu0 0
      %1883 = vmatprep.subr.bf16.mxu0 0
      %1884 = vmatpush1.bf16.msra.mxu0 0
      %1885 = vmatprep.mubr.bf16.mxu0 0
      %1886 = vmatmul.mubr.bf16.gmra.mrb[0].mxu0 %v1781
      %v1887 = vpop.f32.mrb[0].mxu0
      %v1888 = vadd.f32 %v1803, %v1887
      %v1889 = vpop.f32.mrb[0].mxu0
      %v1890 = vpop.f32.mrb[0].mxu0
      %v1891 = vadd.f32 %v1803, %v1890
      %v1892 = vpop.f32.mrb[0].mxu0
      %1893 = vdwg.mxu0
      %1894 = vst [vmem:[#allocation12] sm:$0xff] %v1888
      %1895 = vst [vmem:[#allocation12 + $0x8] sm:$0xff] %v1891
    $region49: #{tpu_custom_call.1} parent=1 // pred_fallthru
      _
    // Predicated region
    $region50: #{tpu_custom_call.1} parent=1 // pred_check
      _
    $region51: #{tpu_custom_call.1} parent=1 // pred_check_branch
      %1897 = sbr.rel (0) target = $region53
    $region52: #{tpu_custom_call.1} parent=1 // pred_region
      %s1899 = ssub.s32 256, 256
      %1900 = vsyncadd [#allocation6], %s1899
      %s1901 = sshll.u32 [#allocation12], 4
      %s1902 = int_to_ptr.vmem [resolvable:$true] %s1901
      %1907 = dma.vmem_to_hbm [thread:$0]  %s1902, 256, %s6, [#allocation6], 128, 128, 8
    $region53: #{tpu_custom_call.1} parent=1 // pred_fallthru
      _
    // Predicated region
    $region54: #{tpu_custom_call.1} parent=1 // pred_check
      _
    $region55: #{tpu_custom_call.1} parent=1 // pred_check_branch
      %1909 = sbr.rel (0) target = $region57
    $region56: #{tpu_custom_call.1} parent=1 // pred_region
      %1910 = dma.done [#allocation6], 256
    $region57: #{tpu_custom_call.1} parent=1 // pred_fallthru
      _
    %1911 = vsyncpa [#allocation5], 1
    %1912 = vsyncpa [#allocation8], 1
    %1913 = vsyncpa [#allocation11], 1
    %1914 = vsyncpa [#allocation6], 1

</llo_original>
